<compile_context>
chip_gen: v5e
topology: v5e:2x2
jax: 0.10.0
libtpu: 0.0.40
codegen_flags: <defaults>
</compile_context>

<pallas_src>
import functools

import numpy as np

import jax
import jax.numpy as jnp
from jax.experimental import pallas as pl
from jax.experimental.pallas import tpu as pltpu


# ---------------------------------------------------------------------------
# Host-side weight packing (done once, outside jit)
# ---------------------------------------------------------------------------
def _pack_conv_weights(w, w_in, n_wo, out_cols=256, odd_offset=128):
    """Pack (Co, Ci, K, K) conv weights into one fused block-Toeplitz matrix.

    Result shape (K, Ci*w_in, out_cols).  With input rows laid out as
    cols = ci*w_in + w, for vertical tap kh:
      columns [0 : Co*n_wo]                 -> conv output at w = 2*wo   (even pool tap)
      columns [odd_offset : odd_offset+Co*n_wo] -> conv output at w = 2*wo+1 (odd pool tap)
    i.e. the horizontal half of the following 2x2 pooling is folded in.
    """
    w = np.asarray(w, np.float32)
    co_n, ci_n, k, _ = w.shape
    a = np.zeros((k, ci_n * w_in, out_cols), np.float32)
    for kh in range(k):
        for co in range(co_n):
            for ci in range(ci_n):
                for wo in range(n_wo):
                    for kw in range(k):
                        a[kh, ci * w_in + 2 * wo + kw, co * n_wo + wo] = w[co, ci, kh, kw]
                        a[kh, ci * w_in + 2 * wo + 1 + kw,
                          odd_offset + co * n_wo + wo] = w[co, ci, kh, kw]
    return a


def pack_params(params):
    """One-time host-side re-packing of LeNet parameters for the fused kernel."""
    w1 = _pack_conv_weights(params["conv1_w"], 32, 14)       # (5, 96, 256)
    w2 = _pack_conv_weights(params["conv2_w"], 14, 5)        # (5, 84, 256)
    b1 = np.repeat(np.asarray(params["conv1_b"], np.float32), 14)[None, :]   # (1, 84)
    b2 = np.repeat(np.asarray(params["conv2_b"], np.float32), 5)[None, :]    # (1, 80)
    # fc1 weight re-packed so tap i contracts against pooled cols = c*5 + j
    # (torch flatten order is c*25 + i*5 + j).
    m1 = (np.asarray(params["fc1_w"], np.float32)
          .reshape(16, 5, 5, 120).transpose(1, 0, 2, 3).reshape(5, 80, 120))
    packed = dict(
        w1=w1, b1=b1, w2=w2, b2=b2,
        m1=m1, bfc1=np.asarray(params["fc1_b"], np.float32)[None, :],
        wfc2=np.asarray(params["fc2_w"], np.float32),
        bfc2=np.asarray(params["fc2_b"], np.float32)[None, :],
        wfc3=np.asarray(params["fc3_w"], np.float32),
        bfc3=np.asarray(params["fc3_b"], np.float32)[None, :],
    )
    return {k: jnp.asarray(v, jnp.float32) for k, v in packed.items()}


# ---------------------------------------------------------------------------
# Fused Pallas kernel (one batch-tile of TB samples per grid step)
# ---------------------------------------------------------------------------
def _lenet_kernel(x_ref, w1_ref, b1_ref, w2_ref, b2_ref,
                  m1_ref, bfc1_ref, wfc2_ref, bfc2_ref, wfc3_ref, bfc3_ref,
                  o_ref,
                  conv1_buf, pool1_buf, conv2_buf, *, tb):
    f32 = jnp.float32
    r1 = tb * 32 - 4      # valid (shiftable) conv1 slab rows
    r2 = tb * 16 - 4      # valid (shiftable) conv2 slab rows

    # ---- conv1 (5x5) + relu + 2x2 maxpool, batched over the whole tile -----
    # x_ref rows = (n, h_in), cols = (ci, w_in)  -> (TB*32, 96)
    b1 = b1_ref[...]                                                   # (1, 84)
    acc1 = jnp.zeros((r1, 256), f32)
    for kh in range(5):                                                # 5 MXU pushes total
        xs = x_ref[pl.ds(kh, r1), :]                                   # (r1, 96)
        acc1 = acc1 + jnp.dot(xs, w1_ref[kh], preferred_element_type=f32)
    # relu(maxpool) == maxpool(relu) (monotone); fold even/odd horizontal taps.
    y1 = jnp.maximum(jnp.maximum(acc1[:, :84], acc1[:, 128:212]) + b1, 0.0)
    conv1_buf[pl.ds(0, r1), :] = y1
    conv1_buf[pl.ds(r1, 4), :] = jnp.zeros((4, 84), f32)               # keep tail finite
    # Vertical max-pool: one strided-sublane read per slab.  Per-sample rows
    # 14/15 of pool1 are garbage but are never read by conv2 (h1+kh <= 13).
    even = conv1_buf[pl.ds(0, tb * 16, stride=2), :]
    odd = conv1_buf[pl.ds(1, tb * 16, stride=2), :]
    pool1_buf[...] = jnp.maximum(even, odd)                            # (TB*16, 84)

    # ---- conv2 (5x5) + relu + 2x2 avgpool (horizontal half) ---------------
    b2 = b2_ref[...]                                                   # (1, 80)
    acc2 = jnp.zeros((r2, 256), f32)
    for kh in range(5):
        xs = pool1_buf[pl.ds(kh, r2), :]                               # (r2, 84)
        acc2 = acc2 + jnp.dot(xs, w2_ref[kh], preferred_element_type=f32)
    # relu BEFORE averaging (conv2 -> relu2 -> AvgPool2d).
    za = jnp.maximum(acc2[:, :80] + b2, 0.0)
    zb = jnp.maximum(acc2[:, 128:208] + b2, 0.0)
    conv2_buf[pl.ds(0, r2), :] = za + zb                               # horizontal sum

    # ---- vertical avg-pool (i-major) + fc1 + relu, fc2 + relu, fc3 ---------
    acc = jnp.zeros((tb, 120), f32)
    for i in range(5):
        ev = conv2_buf[pl.ds(2 * i, tb, stride=16), :]                 # (TB, 80) h1 = 2i
        od = conv2_buf[pl.ds(2 * i + 1, tb, stride=16), :]             # (TB, 80) h1 = 2i+1
        p_i = (ev + od) * 0.25                                         # pooled row i, all samples
        acc = acc + jnp.dot(p_i, m1_ref[i], preferred_element_type=f32)
    h = jnp.maximum(acc + bfc1_ref[...], 0.0)                          # (TB, 120)
    h = jnp.maximum(jnp.dot(h, wfc2_ref[...], preferred_element_type=f32)
                    + bfc2_ref[...], 0.0)                              # (TB, 84)
    o_ref[...] = (jnp.dot(h, wfc3_ref[...], preferred_element_type=f32)
                  + bfc3_ref[...])                                     # (TB, 10)


@jax.jit
def lenet_forward(packed, x):
    n = x.shape[0]
    assert x.shape[1:] == (3, 32, 32), x.shape
    tb = min(64, n)                         # samples per grid tile
    npad = -(-n // tb) * tb                 # pad batch to a tile multiple
    if npad != n:
        x = jnp.pad(x, ((0, npad - n), (0, 0), (0, 0), (0, 0)))
    # rows = (n, h), cols = (ci, w): cheap host-graph relayout of the input.
    x2d = x.transpose(0, 2, 1, 3).reshape(npad * 32, 3 * 32)           # (Npad*32, 96)

    kernel = functools.partial(_lenet_kernel, tb=tb)
    out = pl.pallas_call(
        kernel,
        out_shape=jax.ShapeDtypeStruct((npad, 10), jnp.float32),
        grid=(npad // tb,),
        in_specs=[
            pl.BlockSpec((tb * 32, 96), lambda i: (i, 0)),    # input tile
            pl.BlockSpec((5, 96, 256), lambda i: (0, 0, 0)),  # conv1 packed weights
            pl.BlockSpec((1, 84), lambda i: (0, 0)),          # conv1 bias (repeated)
            pl.BlockSpec((5, 84, 256), lambda i: (0, 0, 0)),  # conv2 packed weights
            pl.BlockSpec((1, 80), lambda i: (0, 0)),          # conv2 bias (repeated)
            pl.BlockSpec((5, 80, 120), lambda i: (0, 0, 0)),  # fc1 re-packed
            pl.BlockSpec((1, 120), lambda i: (0, 0)),
            pl.BlockSpec((120, 84), lambda i: (0, 0)),
            pl.BlockSpec((1, 84), lambda i: (0, 0)),
            pl.BlockSpec((84, 10), lambda i: (0, 0)),
            pl.BlockSpec((1, 10), lambda i: (0, 0)),
        ],
        out_specs=pl.BlockSpec((tb, 10), lambda i: (i, 0)),
        scratch_shapes=[
            pltpu.VMEM((tb * 32, 84), jnp.float32),   # conv1 + horizontal max
            pltpu.VMEM((tb * 16, 84), jnp.float32),   # pool1 activations
            pltpu.VMEM((tb * 16, 80), jnp.float32),   # conv2 + horizontal sum
        ],
        compiler_params=pltpu.CompilerParams(
            dimension_semantics=("parallel",),        # v7x: 2 TCs split the batch tiles
            vmem_limit_bytes=32 * 1024 * 1024,        # explicit, well under v7x 64 MiB
        ),
    )(x2d,
      packed["w1"], packed["b1"], packed["w2"], packed["b2"],
      packed["m1"], packed["bfc1"],
      packed["wfc2"], packed["bfc2"],
      packed["wfc3"], packed["bfc3"])
    return out[:n]


# ---------------------------------------------------------------------------
# Parameter init (matches the PyTorch module's layer shapes) and a pure-JAX
# reference used for a self-check.
# ---------------------------------------------------------------------------
def init_params(key):
    ks = jax.random.split(key, 10)

    def dense_init(kw, kb, fan_in, shape_w, shape_b):
        bound = 1.0 / np.sqrt(fan_in)
        w = jax.random.uniform(kw, shape_w, jnp.float32, -bound, bound)
        b = jax.random.uniform(kb, shape_b, jnp.float32, -bound, bound)
        return w, b

    params = {}
    params["conv1_w"], params["conv1_b"] = dense_init(ks[0], ks[1], 3 * 5 * 5,
                                                      (6, 3, 5, 5), (6,))
    params["conv2_w"], params["conv2_b"] = dense_init(ks[2], ks[3], 6 * 5 * 5,
                                                      (16, 6, 5, 5), (16,))
    params["fc1_w"], params["fc1_b"] = dense_init(ks[4], ks[5], 400, (400, 120), (120,))
    params["fc2_w"], params["fc2_b"] = dense_init(ks[6], ks[7], 120, (120, 84), (84,))
    params["fc3_w"], params["fc3_b"] = dense_init(ks[8], ks[9], 84, (84, 10), (10,))
    return params


def lenet_reference(params, x):
    hp = jax.lax.Precision.HIGHEST
    y = jax.lax.conv_general_dilated(
        x, params["conv1_w"], (1, 1), "VALID",
        dimension_numbers=("NCHW", "OIHW", "NCHW"), precision=hp)
    y = jnp.maximum(y + params["conv1_b"].reshape(1, -1, 1, 1), 0.0)
    n, c, h, w = y.shape
    y = y.reshape(n, c, h // 2, 2, w // 2, 2).max(axis=(3, 5))
    y = jax.lax.conv_general_dilated(
        y, params["conv2_w"], (1, 1), "VALID",
        dimension_numbers=("NCHW", "OIHW", "NCHW"), precision=hp)
    y = jnp.maximum(y + params["conv2_b"].reshape(1, -1, 1, 1), 0.0)
    n, c, h, w = y.shape
    y = y.reshape(n, c, h // 2, 2, w // 2, 2).mean(axis=(3, 5))
    y = y.reshape(n, -1)
    y = jnp.maximum(jnp.dot(y, params["fc1_w"], precision=hp) + params["fc1_b"], 0.0)
    y = jnp.maximum(jnp.dot(y, params["fc2_w"], precision=hp) + params["fc2_b"], 0.0)
    return jnp.dot(y, params["fc3_w"], precision=hp) + params["fc3_b"]


if __name__ == "__main__":
    key = jax.random.PRNGKey(0)
    k_param, k_x = jax.random.split(key)
    params = init_params(k_param)
    packed = pack_params(params)            # one-time, outside jit
    x = jax.random.normal(k_x, (2, 3, 32, 32), dtype=jnp.float32)

    out = jax.block_until_ready(lenet_forward(packed, x))
    assert out.shape == (2, 10), out.shape

    ref = jax.block_until_ready(lenet_reference(params, x))
    max_err = float(jnp.max(jnp.abs(out - ref)))
    assert jnp.allclose(out, ref, rtol=1e-2, atol=1e-2), max_err

    print("KERNEL_OK")
</pallas_src>

<mosaic_0001>
module attributes {stable_mosaic.version = 11 : i64} {
  func.func @_lenet_kernel(%arg0: i32, %arg1: memref<64x96xf32, #tpu.memory_space<vmem>>, %arg2: memref<5x96x256xf32, #tpu.memory_space<vmem>>, %arg3: memref<1x84xf32, #tpu.memory_space<vmem>>, %arg4: memref<5x84x256xf32, #tpu.memory_space<vmem>>, %arg5: memref<1x80xf32, #tpu.memory_space<vmem>>, %arg6: memref<5x80x120xf32, #tpu.memory_space<vmem>>, %arg7: memref<1x120xf32, #tpu.memory_space<vmem>>, %arg8: memref<120x84xf32, #tpu.memory_space<vmem>>, %arg9: memref<1x84xf32, #tpu.memory_space<vmem>>, %arg10: memref<84x10xf32, #tpu.memory_space<vmem>>, %arg11: memref<1x10xf32, #tpu.memory_space<vmem>>, %arg12: memref<2x10xf32, #tpu.memory_space<vmem>>, %arg13: memref<64x84xf32, #tpu.memory_space<vmem>>, %arg14: memref<32x84xf32, #tpu.memory_space<vmem>>, %arg15: memref<32x80xf32, #tpu.memory_space<vmem>>) attributes {dimension_semantics = [#tpu.dimension_semantics<parallel>], iteration_bounds = array<i64: 1>, scalar_prefetch = 0 : i64, scratch_operands = 3 : i64, tpu.core_type = #tpu.core_type<tc>, window_params = [{transform_indices = @transform_0, window_bounds = array<i64: 64, 96>}, {pipeline_mode = #tpu.pipeline_mode<synchronous>, transform_indices = @transform_1, window_bounds = array<i64: 5, 96, 256>}, {pipeline_mode = #tpu.pipeline_mode<synchronous>, transform_indices = @transform_2, window_bounds = array<i64: 1, 84>}, {pipeline_mode = #tpu.pipeline_mode<synchronous>, transform_indices = @transform_3, window_bounds = array<i64: 5, 84, 256>}, {pipeline_mode = #tpu.pipeline_mode<synchronous>, transform_indices = @transform_4, window_bounds = array<i64: 1, 80>}, {pipeline_mode = #tpu.pipeline_mode<synchronous>, transform_indices = @transform_5, window_bounds = array<i64: 5, 80, 120>}, {pipeline_mode = #tpu.pipeline_mode<synchronous>, transform_indices = @transform_6, window_bounds = array<i64: 1, 120>}, {pipeline_mode = #tpu.pipeline_mode<synchronous>, transform_indices = @transform_7, window_bounds = array<i64: 120, 84>}, {pipeline_mode = #tpu.pipeline_mode<synchronous>, transform_indices = @transform_8, window_bounds = array<i64: 1, 84>}, {pipeline_mode = #tpu.pipeline_mode<synchronous>, transform_indices = @transform_9, window_bounds = array<i64: 84, 10>}, {pipeline_mode = #tpu.pipeline_mode<synchronous>, transform_indices = @transform_10, window_bounds = array<i64: 1, 10>}, {transform_indices = @transform_11, window_bounds = array<i64: 2, 10>}]} {
    %c0 = arith.constant 0 : index
    %c0_0 = arith.constant 0 : index
    %0 = vector.load %arg3[%c0, %c0_0] : memref<1x84xf32, #tpu.memory_space<vmem>>, vector<1x84xf32>
    %cst = arith.constant 0.000000e+00 : f32
    %1 = vector.broadcast %cst : f32 to vector<60x256xf32>
    %c0_1 = arith.constant 0 : index
    %c0_2 = arith.constant 0 : index
    %2 = vector.load %arg1[%c0_1, %c0_2] : memref<64x96xf32, #tpu.memory_space<vmem>>, vector<60x96xf32>
    %c0_3 = arith.constant 0 : index
    %c0_4 = arith.constant 0 : index
    %c0_5 = arith.constant 0 : index
    %3 = vector.load %arg2[%c0_3, %c0_4, %c0_5] : memref<5x96x256xf32, #tpu.memory_space<vmem>>, vector<1x96x256xf32>
    %4 = vector.shape_cast %3 : vector<1x96x256xf32> to vector<96x256xf32>
    %cst_6 = arith.constant dense<0.000000e+00> : vector<60x256xf32>
    %5 = tpu.matmul %2, %4, %cst_6 {dimension_numbers = #tpu.dot_dimension_numbers<[1], [0], [0], [1], [0, 0, 1, 1], [], []>} : vector<60x96xf32>, vector<96x256xf32>, vector<60x256xf32> -> vector<60x256xf32>
    %6 = arith.addf %1, %5 : vector<60x256xf32>
    %c1 = arith.constant 1 : index
    %c0_7 = arith.constant 0 : index
    %7 = vector.load %arg1[%c1, %c0_7] : memref<64x96xf32, #tpu.memory_space<vmem>>, vector<60x96xf32>
    %c1_8 = arith.constant 1 : index
    %c0_9 = arith.constant 0 : index
    %c0_10 = arith.constant 0 : index
    %8 = vector.load %arg2[%c1_8, %c0_9, %c0_10] : memref<5x96x256xf32, #tpu.memory_space<vmem>>, vector<1x96x256xf32>
    %9 = vector.shape_cast %8 : vector<1x96x256xf32> to vector<96x256xf32>
    %cst_11 = arith.constant dense<0.000000e+00> : vector<60x256xf32>
    %10 = tpu.matmul %7, %9, %cst_11 {dimension_numbers = #tpu.dot_dimension_numbers<[1], [0], [0], [1], [0, 0, 1, 1], [], []>} : vector<60x96xf32>, vector<96x256xf32>, vector<60x256xf32> -> vector<60x256xf32>
    %11 = arith.addf %6, %10 : vector<60x256xf32>
    %c2 = arith.constant 2 : index
    %c0_12 = arith.constant 0 : index
    %12 = vector.load %arg1[%c2, %c0_12] : memref<64x96xf32, #tpu.memory_space<vmem>>, vector<60x96xf32>
    %c2_13 = arith.constant 2 : index
    %c0_14 = arith.constant 0 : index
    %c0_15 = arith.constant 0 : index
    %13 = vector.load %arg2[%c2_13, %c0_14, %c0_15] : memref<5x96x256xf32, #tpu.memory_space<vmem>>, vector<1x96x256xf32>
    %14 = vector.shape_cast %13 : vector<1x96x256xf32> to vector<96x256xf32>
    %cst_16 = arith.constant dense<0.000000e+00> : vector<60x256xf32>
    %15 = tpu.matmul %12, %14, %cst_16 {dimension_numbers = #tpu.dot_dimension_numbers<[1], [0], [0], [1], [0, 0, 1, 1], [], []>} : vector<60x96xf32>, vector<96x256xf32>, vector<60x256xf32> -> vector<60x256xf32>
    %16 = arith.addf %11, %15 : vector<60x256xf32>
    %c3 = arith.constant 3 : index
    %c0_17 = arith.constant 0 : index
    %17 = vector.load %arg1[%c3, %c0_17] : memref<64x96xf32, #tpu.memory_space<vmem>>, vector<60x96xf32>
    %c3_18 = arith.constant 3 : index
    %c0_19 = arith.constant 0 : index
    %c0_20 = arith.constant 0 : index
    %18 = vector.load %arg2[%c3_18, %c0_19, %c0_20] : memref<5x96x256xf32, #tpu.memory_space<vmem>>, vector<1x96x256xf32>
    %19 = vector.shape_cast %18 : vector<1x96x256xf32> to vector<96x256xf32>
    %cst_21 = arith.constant dense<0.000000e+00> : vector<60x256xf32>
    %20 = tpu.matmul %17, %19, %cst_21 {dimension_numbers = #tpu.dot_dimension_numbers<[1], [0], [0], [1], [0, 0, 1, 1], [], []>} : vector<60x96xf32>, vector<96x256xf32>, vector<60x256xf32> -> vector<60x256xf32>
    %21 = arith.addf %16, %20 : vector<60x256xf32>
    %c4 = arith.constant 4 : index
    %c0_22 = arith.constant 0 : index
    %22 = vector.load %arg1[%c4, %c0_22] : memref<64x96xf32, #tpu.memory_space<vmem>>, vector<60x96xf32>
    %c4_23 = arith.constant 4 : index
    %c0_24 = arith.constant 0 : index
    %c0_25 = arith.constant 0 : index
    %23 = vector.load %arg2[%c4_23, %c0_24, %c0_25] : memref<5x96x256xf32, #tpu.memory_space<vmem>>, vector<1x96x256xf32>
    %24 = vector.shape_cast %23 : vector<1x96x256xf32> to vector<96x256xf32>
    %cst_26 = arith.constant dense<0.000000e+00> : vector<60x256xf32>
    %25 = tpu.matmul %22, %24, %cst_26 {dimension_numbers = #tpu.dot_dimension_numbers<[1], [0], [0], [1], [0, 0, 1, 1], [], []>} : vector<60x96xf32>, vector<96x256xf32>, vector<60x256xf32> -> vector<60x256xf32>
    %26 = arith.addf %21, %25 : vector<60x256xf32>
    %27 = vector.extract_strided_slice %26 {offsets = [0, 0], sizes = [60, 84], strides = [1, 1]} : vector<60x256xf32> to vector<60x84xf32>
    %28 = vector.extract_strided_slice %26 {offsets = [0, 128], sizes = [60, 84], strides = [1, 1]} : vector<60x256xf32> to vector<60x84xf32>
    %29 = arith.maximumf %27, %28 : vector<60x84xf32>
    %30 = vector.broadcast %0 : vector<1x84xf32> to vector<60x84xf32>
    %31 = arith.addf %29, %30 : vector<60x84xf32>
    %cst_27 = arith.constant 0.000000e+00 : f32
    %32 = vector.broadcast %cst_27 : f32 to vector<60x84xf32>
    %33 = arith.maximumf %31, %32 : vector<60x84xf32>
    %c0_28 = arith.constant 0 : index
    %c0_29 = arith.constant 0 : index
    %34 = vector.load %arg13[%c0_28, %c0_29] : memref<64x84xf32, #tpu.memory_space<vmem>>, vector<60x84xf32>
    tpu.vector_store %arg13[%c0_28, %c0_29], %33 {strides = array<i32>} : memref<64x84xf32, #tpu.memory_space<vmem>>, vector<60x84xf32>,
    %cst_30 = arith.constant 0.000000e+00 : f32
    %35 = vector.broadcast %cst_30 : f32 to vector<4x84xf32>
    %c60 = arith.constant 60 : index
    %c0_31 = arith.constant 0 : index
    %36 = vector.load %arg13[%c60, %c0_31] : memref<64x84xf32, #tpu.memory_space<vmem>>, vector<4x84xf32>
    tpu.vector_store %arg13[%c60, %c0_31], %35 {strides = array<i32>} : memref<64x84xf32, #tpu.memory_space<vmem>>, vector<4x84xf32>,
    %c0_32 = arith.constant 0 : index
    %c0_33 = arith.constant 0 : index
    %37 = tpu.strided_load %arg13[%c0_32, %c0_33] {strides = array<i32: 2, 1>} : memref<64x84xf32, #tpu.memory_space<vmem>>, vector<32x84xf32>
    %c1_34 = arith.constant 1 : index
    %c0_35 = arith.constant 0 : index
    %38 = tpu.strided_load %arg13[%c1_34, %c0_35] {strides = array<i32: 2, 1>} : memref<64x84xf32, #tpu.memory_space<vmem>>, vector<32x84xf32>
    %39 = arith.maximumf %37, %38 : vector<32x84xf32>
    %c0_36 = arith.constant 0 : index
    %c0_37 = arith.constant 0 : index
    %40 = vector.load %arg14[%c0_36, %c0_37] : memref<32x84xf32, #tpu.memory_space<vmem>>, vector<32x84xf32>
    tpu.vector_store %arg14[%c0_36, %c0_37], %39 {strides = array<i32>} : memref<32x84xf32, #tpu.memory_space<vmem>>, vector<32x84xf32>,
    %c0_38 = arith.constant 0 : index
    %c0_39 = arith.constant 0 : index
    %41 = vector.load %arg5[%c0_38, %c0_39] : memref<1x80xf32, #tpu.memory_space<vmem>>, vector<1x80xf32>
    %cst_40 = arith.constant 0.000000e+00 : f32
    %42 = vector.broadcast %cst_40 : f32 to vector<28x256xf32>
    %c0_41 = arith.constant 0 : index
    %c0_42 = arith.constant 0 : index
    %43 = vector.load %arg14[%c0_41, %c0_42] : memref<32x84xf32, #tpu.memory_space<vmem>>, vector<28x84xf32>
    %c0_43 = arith.constant 0 : index
    %c0_44 = arith.constant 0 : index
    %c0_45 = arith.constant 0 : index
    %44 = vector.load %arg4[%c0_43, %c0_44, %c0_45] : memref<5x84x256xf32, #tpu.memory_space<vmem>>, vector<1x84x256xf32>
    %45 = vector.shape_cast %44 : vector<1x84x256xf32> to vector<84x256xf32>
    %cst_46 = arith.constant dense<0.000000e+00> : vector<28x256xf32>
    %46 = tpu.matmul %43, %45, %cst_46 {dimension_numbers = #tpu.dot_dimension_numbers<[1], [0], [0], [1], [0, 0, 1, 1], [], []>} : vector<28x84xf32>, vector<84x256xf32>, vector<28x256xf32> -> vector<28x256xf32>
    %47 = arith.addf %42, %46 : vector<28x256xf32>
    %c1_47 = arith.constant 1 : index
    %c0_48 = arith.constant 0 : index
    %48 = vector.load %arg14[%c1_47, %c0_48] : memref<32x84xf32, #tpu.memory_space<vmem>>, vector<28x84xf32>
    %c1_49 = arith.constant 1 : index
    %c0_50 = arith.constant 0 : index
    %c0_51 = arith.constant 0 : index
    %49 = vector.load %arg4[%c1_49, %c0_50, %c0_51] : memref<5x84x256xf32, #tpu.memory_space<vmem>>, vector<1x84x256xf32>
    %50 = vector.shape_cast %49 : vector<1x84x256xf32> to vector<84x256xf32>
    %cst_52 = arith.constant dense<0.000000e+00> : vector<28x256xf32>
    %51 = tpu.matmul %48, %50, %cst_52 {dimension_numbers = #tpu.dot_dimension_numbers<[1], [0], [0], [1], [0, 0, 1, 1], [], []>} : vector<28x84xf32>, vector<84x256xf32>, vector<28x256xf32> -> vector<28x256xf32>
    %52 = arith.addf %47, %51 : vector<28x256xf32>
    %c2_53 = arith.constant 2 : index
    %c0_54 = arith.constant 0 : index
    %53 = vector.load %arg14[%c2_53, %c0_54] : memref<32x84xf32, #tpu.memory_space<vmem>>, vector<28x84xf32>
    %c2_55 = arith.constant 2 : index
    %c0_56 = arith.constant 0 : index
    %c0_57 = arith.constant 0 : index
    %54 = vector.load %arg4[%c2_55, %c0_56, %c0_57] : memref<5x84x256xf32, #tpu.memory_space<vmem>>, vector<1x84x256xf32>
    %55 = vector.shape_cast %54 : vector<1x84x256xf32> to vector<84x256xf32>
    %cst_58 = arith.constant dense<0.000000e+00> : vector<28x256xf32>
    %56 = tpu.matmul %53, %55, %cst_58 {dimension_numbers = #tpu.dot_dimension_numbers<[1], [0], [0], [1], [0, 0, 1, 1], [], []>} : vector<28x84xf32>, vector<84x256xf32>, vector<28x256xf32> -> vector<28x256xf32>
    %57 = arith.addf %52, %56 : vector<28x256xf32>
    %c3_59 = arith.constant 3 : index
    %c0_60 = arith.constant 0 : index
    %58 = vector.load %arg14[%c3_59, %c0_60] : memref<32x84xf32, #tpu.memory_space<vmem>>, vector<28x84xf32>
    %c3_61 = arith.constant 3 : index
    %c0_62 = arith.constant 0 : index
    %c0_63 = arith.constant 0 : index
    %59 = vector.load %arg4[%c3_61, %c0_62, %c0_63] : memref<5x84x256xf32, #tpu.memory_space<vmem>>, vector<1x84x256xf32>
    %60 = vector.shape_cast %59 : vector<1x84x256xf32> to vector<84x256xf32>
    %cst_64 = arith.constant dense<0.000000e+00> : vector<28x256xf32>
    %61 = tpu.matmul %58, %60, %cst_64 {dimension_numbers = #tpu.dot_dimension_numbers<[1], [0], [0], [1], [0, 0, 1, 1], [], []>} : vector<28x84xf32>, vector<84x256xf32>, vector<28x256xf32> -> vector<28x256xf32>
    %62 = arith.addf %57, %61 : vector<28x256xf32>
    %c4_65 = arith.constant 4 : index
    %c0_66 = arith.constant 0 : index
    %63 = vector.load %arg14[%c4_65, %c0_66] : memref<32x84xf32, #tpu.memory_space<vmem>>, vector<28x84xf32>
    %c4_67 = arith.constant 4 : index
    %c0_68 = arith.constant 0 : index
    %c0_69 = arith.constant 0 : index
    %64 = vector.load %arg4[%c4_67, %c0_68, %c0_69] : memref<5x84x256xf32, #tpu.memory_space<vmem>>, vector<1x84x256xf32>
    %65 = vector.shape_cast %64 : vector<1x84x256xf32> to vector<84x256xf32>
    %cst_70 = arith.constant dense<0.000000e+00> : vector<28x256xf32>
    %66 = tpu.matmul %63, %65, %cst_70 {dimension_numbers = #tpu.dot_dimension_numbers<[1], [0], [0], [1], [0, 0, 1, 1], [], []>} : vector<28x84xf32>, vector<84x256xf32>, vector<28x256xf32> -> vector<28x256xf32>
    %67 = arith.addf %62, %66 : vector<28x256xf32>
    %68 = vector.extract_strided_slice %67 {offsets = [0, 0], sizes = [28, 80], strides = [1, 1]} : vector<28x256xf32> to vector<28x80xf32>
    %69 = vector.broadcast %41 : vector<1x80xf32> to vector<28x80xf32>
    %70 = arith.addf %68, %69 : vector<28x80xf32>
    %cst_71 = arith.constant 0.000000e+00 : f32
    %71 = vector.broadcast %cst_71 : f32 to vector<28x80xf32>
    %72 = arith.maximumf %70, %71 : vector<28x80xf32>
    %73 = vector.extract_strided_slice %67 {offsets = [0, 128], sizes = [28, 80], strides = [1, 1]} : vector<28x256xf32> to vector<28x80xf32>
    %74 = vector.broadcast %41 : vector<1x80xf32> to vector<28x80xf32>
    %75 = arith.addf %73, %74 : vector<28x80xf32>
    %cst_72 = arith.constant 0.000000e+00 : f32
    %76 = vector.broadcast %cst_72 : f32 to vector<28x80xf32>
    %77 = arith.maximumf %75, %76 : vector<28x80xf32>
    %78 = arith.addf %72, %77 : vector<28x80xf32>
    %c0_73 = arith.constant 0 : index
    %c0_74 = arith.constant 0 : index
    %79 = vector.load %arg15[%c0_73, %c0_74] : memref<32x80xf32, #tpu.memory_space<vmem>>, vector<28x80xf32>
    tpu.vector_store %arg15[%c0_73, %c0_74], %78 {strides = array<i32>} : memref<32x80xf32, #tpu.memory_space<vmem>>, vector<28x80xf32>,
    %cst_75 = arith.constant 0.000000e+00 : f32
    %80 = vector.broadcast %cst_75 : f32 to vector<2x120xf32>
    %c0_76 = arith.constant 0 : index
    %c0_77 = arith.constant 0 : index
    %81 = tpu.strided_load %arg15[%c0_76, %c0_77] {strides = array<i32: 16, 1>} : memref<32x80xf32, #tpu.memory_space<vmem>>, vector<2x80xf32>
    %c1_78 = arith.constant 1 : index
    %c0_79 = arith.constant 0 : index
    %82 = tpu.strided_load %arg15[%c1_78, %c0_79] {strides = array<i32: 16, 1>} : memref<32x80xf32, #tpu.memory_space<vmem>>, vector<2x80xf32>
    %83 = arith.addf %81, %82 : vector<2x80xf32>
    %cst_80 = arith.constant 2.500000e-01 : f32
    %84 = vector.broadcast %cst_80 : f32 to vector<2x80xf32>
    %85 = arith.mulf %83, %84 : vector<2x80xf32>
    %c0_81 = arith.constant 0 : index
    %c0_82 = arith.constant 0 : index
    %c0_83 = arith.constant 0 : index
    %86 = vector.load %arg6[%c0_81, %c0_82, %c0_83] : memref<5x80x120xf32, #tpu.memory_space<vmem>>, vector<1x80x120xf32>
    %87 = vector.shape_cast %86 : vector<1x80x120xf32> to vector<80x120xf32>
    %cst_84 = arith.constant dense<0.000000e+00> : vector<2x120xf32>
    %88 = tpu.matmul %85, %87, %cst_84 {dimension_numbers = #tpu.dot_dimension_numbers<[1], [0], [0], [1], [0, 0, 1, 1], [], []>} : vector<2x80xf32>, vector<80x120xf32>, vector<2x120xf32> -> vector<2x120xf32>
    %89 = arith.addf %80, %88 : vector<2x120xf32>
    %c2_85 = arith.constant 2 : index
    %c0_86 = arith.constant 0 : index
    %90 = tpu.strided_load %arg15[%c2_85, %c0_86] {strides = array<i32: 16, 1>} : memref<32x80xf32, #tpu.memory_space<vmem>>, vector<2x80xf32>
    %c3_87 = arith.constant 3 : index
    %c0_88 = arith.constant 0 : index
    %91 = tpu.strided_load %arg15[%c3_87, %c0_88] {strides = array<i32: 16, 1>} : memref<32x80xf32, #tpu.memory_space<vmem>>, vector<2x80xf32>
    %92 = arith.addf %90, %91 : vector<2x80xf32>
    %cst_89 = arith.constant 2.500000e-01 : f32
    %93 = vector.broadcast %cst_89 : f32 to vector<2x80xf32>
    %94 = arith.mulf %92, %93 : vector<2x80xf32>
    %c1_90 = arith.constant 1 : index
    %c0_91 = arith.constant 0 : index
    %c0_92 = arith.constant 0 : index
    %95 = vector.load %arg6[%c1_90, %c0_91, %c0_92] : memref<5x80x120xf32, #tpu.memory_space<vmem>>, vector<1x80x120xf32>
    %96 = vector.shape_cast %95 : vector<1x80x120xf32> to vector<80x120xf32>
    %cst_93 = arith.constant dense<0.000000e+00> : vector<2x120xf32>
    %97 = tpu.matmul %94, %96, %cst_93 {dimension_numbers = #tpu.dot_dimension_numbers<[1], [0], [0], [1], [0, 0, 1, 1], [], []>} : vector<2x80xf32>, vector<80x120xf32>, vector<2x120xf32> -> vector<2x120xf32>
    %98 = arith.addf %89, %97 : vector<2x120xf32>
    %c4_94 = arith.constant 4 : index
    %c0_95 = arith.constant 0 : index
    %99 = tpu.strided_load %arg15[%c4_94, %c0_95] {strides = array<i32: 16, 1>} : memref<32x80xf32, #tpu.memory_space<vmem>>, vector<2x80xf32>
    %c5 = arith.constant 5 : index
    %c0_96 = arith.constant 0 : index
    %100 = tpu.strided_load %arg15[%c5, %c0_96] {strides = array<i32: 16, 1>} : memref<32x80xf32, #tpu.memory_space<vmem>>, vector<2x80xf32>
    %101 = arith.addf %99, %100 : vector<2x80xf32>
    %cst_97 = arith.constant 2.500000e-01 : f32
    %102 = vector.broadcast %cst_97 : f32 to vector<2x80xf32>
    %103 = arith.mulf %101, %102 : vector<2x80xf32>
    %c2_98 = arith.constant 2 : index
    %c0_99 = arith.constant 0 : index
    %c0_100 = arith.constant 0 : index
    %104 = vector.load %arg6[%c2_98, %c0_99, %c0_100] : memref<5x80x120xf32, #tpu.memory_space<vmem>>, vector<1x80x120xf32>
    %105 = vector.shape_cast %104 : vector<1x80x120xf32> to vector<80x120xf32>
    %cst_101 = arith.constant dense<0.000000e+00> : vector<2x120xf32>
    %106 = tpu.matmul %103, %105, %cst_101 {dimension_numbers = #tpu.dot_dimension_numbers<[1], [0], [0], [1], [0, 0, 1, 1], [], []>} : vector<2x80xf32>, vector<80x120xf32>, vector<2x120xf32> -> vector<2x120xf32>
    %107 = arith.addf %98, %106 : vector<2x120xf32>
    %c6 = arith.constant 6 : index
    %c0_102 = arith.constant 0 : index
    %108 = tpu.strided_load %arg15[%c6, %c0_102] {strides = array<i32: 16, 1>} : memref<32x80xf32, #tpu.memory_space<vmem>>, vector<2x80xf32>
    %c7 = arith.constant 7 : index
    %c0_103 = arith.constant 0 : index
    %109 = tpu.strided_load %arg15[%c7, %c0_103] {strides = array<i32: 16, 1>} : memref<32x80xf32, #tpu.memory_space<vmem>>, vector<2x80xf32>
    %110 = arith.addf %108, %109 : vector<2x80xf32>
    %cst_104 = arith.constant 2.500000e-01 : f32
    %111 = vector.broadcast %cst_104 : f32 to vector<2x80xf32>
    %112 = arith.mulf %110, %111 : vector<2x80xf32>
    %c3_105 = arith.constant 3 : index
    %c0_106 = arith.constant 0 : index
    %c0_107 = arith.constant 0 : index
    %113 = vector.load %arg6[%c3_105, %c0_106, %c0_107] : memref<5x80x120xf32, #tpu.memory_space<vmem>>, vector<1x80x120xf32>
    %114 = vector.shape_cast %113 : vector<1x80x120xf32> to vector<80x120xf32>
    %cst_108 = arith.constant dense<0.000000e+00> : vector<2x120xf32>
    %115 = tpu.matmul %112, %114, %cst_108 {dimension_numbers = #tpu.dot_dimension_numbers<[1], [0], [0], [1], [0, 0, 1, 1], [], []>} : vector<2x80xf32>, vector<80x120xf32>, vector<2x120xf32> -> vector<2x120xf32>
    %116 = arith.addf %107, %115 : vector<2x120xf32>
    %c8 = arith.constant 8 : index
    %c0_109 = arith.constant 0 : index
    %117 = tpu.strided_load %arg15[%c8, %c0_109] {strides = array<i32: 16, 1>} : memref<32x80xf32, #tpu.memory_space<vmem>>, vector<2x80xf32>
    %c9 = arith.constant 9 : index
    %c0_110 = arith.constant 0 : index
    %118 = tpu.strided_load %arg15[%c9, %c0_110] {strides = array<i32: 16, 1>} : memref<32x80xf32, #tpu.memory_space<vmem>>, vector<2x80xf32>
    %119 = arith.addf %117, %118 : vector<2x80xf32>
    %cst_111 = arith.constant 2.500000e-01 : f32
    %120 = vector.broadcast %cst_111 : f32 to vector<2x80xf32>
    %121 = arith.mulf %119, %120 : vector<2x80xf32>
    %c4_112 = arith.constant 4 : index
    %c0_113 = arith.constant 0 : index
    %c0_114 = arith.constant 0 : index
    %122 = vector.load %arg6[%c4_112, %c0_113, %c0_114] : memref<5x80x120xf32, #tpu.memory_space<vmem>>, vector<1x80x120xf32>
    %123 = vector.shape_cast %122 : vector<1x80x120xf32> to vector<80x120xf32>
    %cst_115 = arith.constant dense<0.000000e+00> : vector<2x120xf32>
    %124 = tpu.matmul %121, %123, %cst_115 {dimension_numbers = #tpu.dot_dimension_numbers<[1], [0], [0], [1], [0, 0, 1, 1], [], []>} : vector<2x80xf32>, vector<80x120xf32>, vector<2x120xf32> -> vector<2x120xf32>
    %125 = arith.addf %116, %124 : vector<2x120xf32>
    %c0_116 = arith.constant 0 : index
    %c0_117 = arith.constant 0 : index
    %126 = vector.load %arg7[%c0_116, %c0_117] : memref<1x120xf32, #tpu.memory_space<vmem>>, vector<1x120xf32>
    %127 = vector.broadcast %126 : vector<1x120xf32> to vector<2x120xf32>
    %128 = arith.addf %125, %127 : vector<2x120xf32>
    %cst_118 = arith.constant 0.000000e+00 : f32
    %129 = vector.broadcast %cst_118 : f32 to vector<2x120xf32>
    %130 = arith.maximumf %128, %129 : vector<2x120xf32>
    %c0_119 = arith.constant 0 : index
    %c0_120 = arith.constant 0 : index
    %131 = vector.load %arg8[%c0_119, %c0_120] : memref<120x84xf32, #tpu.memory_space<vmem>>, vector<120x84xf32>
    %cst_121 = arith.constant dense<0.000000e+00> : vector<2x84xf32>
    %132 = tpu.matmul %130, %131, %cst_121 {dimension_numbers = #tpu.dot_dimension_numbers<[1], [0], [0], [1], [0, 0, 1, 1], [], []>} : vector<2x120xf32>, vector<120x84xf32>, vector<2x84xf32> -> vector<2x84xf32>
    %c0_122 = arith.constant 0 : index
    %c0_123 = arith.constant 0 : index
    %133 = vector.load %arg9[%c0_122, %c0_123] : memref<1x84xf32, #tpu.memory_space<vmem>>, vector<1x84xf32>
    %134 = vector.broadcast %133 : vector<1x84xf32> to vector<2x84xf32>
    %135 = arith.addf %132, %134 : vector<2x84xf32>
    %cst_124 = arith.constant 0.000000e+00 : f32
    %136 = vector.broadcast %cst_124 : f32 to vector<2x84xf32>
    %137 = arith.maximumf %135, %136 : vector<2x84xf32>
    %c0_125 = arith.constant 0 : index
    %c0_126 = arith.constant 0 : index
    %138 = vector.load %arg10[%c0_125, %c0_126] : memref<84x10xf32, #tpu.memory_space<vmem>>, vector<84x10xf32>
    %cst_127 = arith.constant dense<0.000000e+00> : vector<2x10xf32>
    %139 = tpu.matmul %137, %138, %cst_127 {dimension_numbers = #tpu.dot_dimension_numbers<[1], [0], [0], [1], [0, 0, 1, 1], [], []>} : vector<2x84xf32>, vector<84x10xf32>, vector<2x10xf32> -> vector<2x10xf32>
    %c0_128 = arith.constant 0 : index
    %c0_129 = arith.constant 0 : index
    %140 = vector.load %arg11[%c0_128, %c0_129] : memref<1x10xf32, #tpu.memory_space<vmem>>, vector<1x10xf32>
    %141 = vector.broadcast %140 : vector<1x10xf32> to vector<2x10xf32>
    %142 = arith.addf %139, %141 : vector<2x10xf32>
    %c0_130 = arith.constant 0 : index
    %c0_131 = arith.constant 0 : index
    %143 = vector.load %arg12[%c0_130, %c0_131] : memref<2x10xf32, #tpu.memory_space<vmem>>, vector<2x10xf32>
    tpu.vector_store %arg12[%c0_130, %c0_131], %142 {strides = array<i32>} : memref<2x10xf32, #tpu.memory_space<vmem>>, vector<2x10xf32>,
    return
  }
  func.func @transform_0(%arg0: i32) -> (i32, i32) {
    %c0_i32 = arith.constant 0 : i32
    %c0_i32_0 = arith.constant 0 : i32
    return %arg0, %c0_i32 : i32, i32
  }
  func.func @transform_1(%arg0: i32) -> (i32, i32, i32) {
    %c0_i32 = arith.constant 0 : i32
    %c0_i32_0 = arith.constant 0 : i32
    %c0_i32_1 = arith.constant 0 : i32
    %c0_i32_2 = arith.constant 0 : i32
    return %c0_i32, %c0_i32_0, %c0_i32_1 : i32, i32, i32
  }
  func.func @transform_2(%arg0: i32) -> (i32, i32) {
    %c0_i32 = arith.constant 0 : i32
    %c0_i32_0 = arith.constant 0 : i32
    %c0_i32_1 = arith.constant 0 : i32
    return %c0_i32, %c0_i32_0 : i32, i32
  }
  func.func @transform_3(%arg0: i32) -> (i32, i32, i32) {
    %c0_i32 = arith.constant 0 : i32
    %c0_i32_0 = arith.constant 0 : i32
    %c0_i32_1 = arith.constant 0 : i32
    %c0_i32_2 = arith.constant 0 : i32
    return %c0_i32, %c0_i32_0, %c0_i32_1 : i32, i32, i32
  }
  func.func @transform_4(%arg0: i32) -> (i32, i32) {
    %c0_i32 = arith.constant 0 : i32
    %c0_i32_0 = arith.constant 0 : i32
    %c0_i32_1 = arith.constant 0 : i32
    return %c0_i32, %c0_i32_0 : i32, i32
  }
  func.func @transform_5(%arg0: i32) -> (i32, i32, i32) {
    %c0_i32 = arith.constant 0 : i32
    %c0_i32_0 = arith.constant 0 : i32
    %c0_i32_1 = arith.constant 0 : i32
    %c0_i32_2 = arith.constant 0 : i32
    return %c0_i32, %c0_i32_0, %c0_i32_1 : i32, i32, i32
  }
  func.func @transform_6(%arg0: i32) -> (i32, i32) {
    %c0_i32 = arith.constant 0 : i32
    %c0_i32_0 = arith.constant 0 : i32
    %c0_i32_1 = arith.constant 0 : i32
    return %c0_i32, %c0_i32_0 : i32, i32
  }
  func.func @transform_7(%arg0: i32) -> (i32, i32) {
    %c0_i32 = arith.constant 0 : i32
    %c0_i32_0 = arith.constant 0 : i32
    %c0_i32_1 = arith.constant 0 : i32
    return %c0_i32, %c0_i32_0 : i32, i32
  }
  func.func @transform_8(%arg0: i32) -> (i32, i32) {
    %c0_i32 = arith.constant 0 : i32
    %c0_i32_0 = arith.constant 0 : i32
    %c0_i32_1 = arith.constant 0 : i32
    return %c0_i32, %c0_i32_0 : i32, i32
  }
  func.func @transform_9(%arg0: i32) -> (i32, i32) {
    %c0_i32 = arith.constant 0 : i32
    %c0_i32_0 = arith.constant 0 : i32
    %c0_i32_1 = arith.constant 0 : i32
    return %c0_i32, %c0_i32_0 : i32, i32
  }
  func.func @transform_10(%arg0: i32) -> (i32, i32) {
    %c0_i32 = arith.constant 0 : i32
    %c0_i32_0 = arith.constant 0 : i32
    %c0_i32_1 = arith.constant 0 : i32
    return %c0_i32, %c0_i32_0 : i32, i32
  }
  func.func @transform_11(%arg0: i32) -> (i32, i32) {
    %c0_i32 = arith.constant 0 : i32
    %c0_i32_0 = arith.constant 0 : i32
    return %arg0, %c0_i32 : i32, i32
  }
}

</mosaic_0001>

<llo_original>
// kernel: lenet_forward.1
$region0: #{lenet_forward.1}
  #allocation0 [shape = 'u32[]', space=smem, size = 0x4, offset = 0x4, fixed_abs, tag = 'smem constant byte address 0x4 - core index']
  #allocation1 [shape = 'u32[72,128]{1,0:T(1,128)}', space=vmem, size = 0x9000, scoped, tag = 'internal scratch']
  #allocation2 [shape = 'f32[64,84]{1,0:T(8,128)}', space=vmem, size = 0x8000, scoped, tag = 'scratch operand']
  #allocation3 [shape = 'f32[32,84]{1,0:T(8,128)}', space=vmem, size = 0x4000, scoped, tag = 'scratch operand']
  #allocation4 [shape = 'f32[32,80]{1,0:T(8,128)}', space=vmem, size = 0x4000, scoped, tag = 'scratch operand']
  %s0 = inlined_call_operand.vmem [shape: f32[64,96], index: 0, kind: input, shape index: {}]
  %s1 = inlined_call_operand.hbm [shape: f32[5,96,256], index: 1, kind: input, shape index: {}]
  %s2 = inlined_call_operand.vmem [shape: f32[1,84], index: 2, kind: input, shape index: {}]
  %s3 = inlined_call_operand.hbm [shape: f32[5,84,256], index: 3, kind: input, shape index: {}]
  %s4 = inlined_call_operand.vmem [shape: f32[1,80], index: 4, kind: input, shape index: {}]
  %s5 = inlined_call_operand.vmem [shape: f32[5,80,120], index: 5, kind: input, shape index: {}]
  %s6 = inlined_call_operand.vmem [shape: f32[1,120], index: 6, kind: input, shape index: {}]
  %s7 = inlined_call_operand.vmem [shape: f32[120,84], index: 7, kind: input, shape index: {}]
  %s8 = inlined_call_operand.vmem [shape: f32[1,84], index: 8, kind: input, shape index: {}]
  %s9 = inlined_call_operand.vmem [shape: f32[84,10], index: 9, kind: input, shape index: {}]
  %s10 = inlined_call_operand.vmem [shape: f32[1,10], index: 10, kind: input, shape index: {}]
  %s11 = inlined_call_operand.hbm [shape: f32[2,10], index: 11, kind: output, shape index: {}]
  %s12 = sld [smem:[#allocation0]]
  $region62: #{lenet_forward.1} parent=0
    _
  %s14 = ssub.s32 1, %s12
  %s15 = scalar_select 0, %s14, %s12
  $region1: #{lenet_forward.1} parent=0
    #allocation5 [shape = 'u8[491520]{0}', space=vmem, size = 0x78000, scoped, tag = 'input window, operand 1, single buffered']
    #allocation6 [shape = 's32[1]{0}', space=sflag, size = 0x4, scoped, tag = 'scoped memory for lenet_forward.1']
    #allocation7 [shape = 's32[1]{0}', space=sflag, size = 0x4, scoped, tag = 'scoped memory for lenet_forward.1']
    #allocation8 [shape = 'u8[450560]{0}', space=vmem, size = 0x6e000, scoped, tag = 'input window, operand 3, single buffered']
    #allocation9 [shape = 's32[1]{0}', space=sflag, size = 0x4, scoped, tag = 'scoped memory for lenet_forward.1']
    #allocation10 [shape = 'u8[1024]{0}', space=vmem, size = 0x400, scoped, tag = 'output window, operand 0, single buffered']
    %16 = vsyncpa [#allocation6], 0
    %17 = vsyncpa [#allocation9], 0
    %18 = vsyncpa [#allocation7], 0
    // Predicated region
    $region2: #{lenet_forward.1} parent=1 // pred_check
      _
    $region3: #{lenet_forward.1} parent=1 // pred_check_branch
      %20 = sbr.rel (0) target = $region5
    $region4: #{lenet_forward.1} parent=1 // pred_region
      _
    $region5: #{lenet_forward.1} parent=1 // pred_fallthru
      _
    // Predicated region
    $region6: #{lenet_forward.1} parent=1 // pred_check
      _
    $region7: #{lenet_forward.1} parent=1 // pred_check_branch
      %22 = sbr.rel (0) target = $region9
    $region8: #{lenet_forward.1} parent=1 // pred_region
      %24 = vsyncadd [#allocation6], 0
      %s25 = sshll.u32 %s1, 4
      %s26 = int_to_ptr.hbm [resolvable:$true] %s25
      %s27 = sshll.u32 [#allocation5], 4
      %s28 = int_to_ptr.vmem [resolvable:$true] %s27
      %33 = dma.hbm_to_vmem [thread:$0]  %s26, 15360, %s28, [#allocation6], 256, 256, 16
    $region9: #{lenet_forward.1} parent=1 // pred_fallthru
      _
    // Predicated region
    $region10: #{lenet_forward.1} parent=1 // pred_check
      _
    $region11: #{lenet_forward.1} parent=1 // pred_check_branch
      %35 = sbr.rel (0) target = $region13
    $region12: #{lenet_forward.1} parent=1 // pred_region
      _
    $region13: #{lenet_forward.1} parent=1 // pred_fallthru
      _
    // Predicated region
    $region14: #{lenet_forward.1} parent=1 // pred_check
      _
    $region15: #{lenet_forward.1} parent=1 // pred_check_branch
      %37 = sbr.rel (0) target = $region17
    $region16: #{lenet_forward.1} parent=1 // pred_region
      %39 = vsyncadd [#allocation9], 0
      %s40 = sshll.u32 %s3, 4
      %s41 = int_to_ptr.hbm [resolvable:$true] %s40
      %s42 = sshll.u32 [#allocation8], 4
      %s43 = int_to_ptr.vmem [resolvable:$true] %s42
      %48 = dma.hbm_to_vmem [thread:$0]  %s41, 14080, %s43, [#allocation9], 256, 256, 16
    $region17: #{lenet_forward.1} parent=1 // pred_fallthru
      _
    // Predicated region
    $region18: #{lenet_forward.1} parent=1 // pred_check
      _
    $region19: #{lenet_forward.1} parent=1 // pred_check_branch
      %50 = sbr.rel (0) target = $region21
    $region20: #{lenet_forward.1} parent=1 // pred_region
      _
    $region21: #{lenet_forward.1} parent=1 // pred_fallthru
      _
    // Predicated region
    $region22: #{lenet_forward.1} parent=1 // pred_check
      _
    $region23: #{lenet_forward.1} parent=1 // pred_check_branch
      %52 = sbr.rel (0) target = $region25
    $region24: #{lenet_forward.1} parent=1 // pred_region
      _
    $region25: #{lenet_forward.1} parent=1 // pred_fallthru
      _
    // Predicated region
    $region26: #{lenet_forward.1} parent=1 // pred_check
      _
    $region27: #{lenet_forward.1} parent=1 // pred_check_branch
      %54 = sbr.rel (0) target = $region29
    $region28: #{lenet_forward.1} parent=1 // pred_region
      _
    $region29: #{lenet_forward.1} parent=1 // pred_fallthru
      _
    // Predicated region
    $region30: #{lenet_forward.1} parent=1 // pred_check
      _
    $region31: #{lenet_forward.1} parent=1 // pred_check_branch
      %56 = sbr.rel (0) target = $region33
    $region32: #{lenet_forward.1} parent=1 // pred_region
      _
    $region33: #{lenet_forward.1} parent=1 // pred_fallthru
      _
    // Predicated region
    $region34: #{lenet_forward.1} parent=1 // pred_check
      _
    $region35: #{lenet_forward.1} parent=1 // pred_check_branch
      %58 = sbr.rel (0) target = $region37
    $region36: #{lenet_forward.1} parent=1 // pred_region
      _
    $region37: #{lenet_forward.1} parent=1 // pred_fallthru
      _
    // Predicated region
    $region38: #{lenet_forward.1} parent=1 // pred_check
      _
    $region39: #{lenet_forward.1} parent=1 // pred_check_branch
      %60 = sbr.rel (0) target = $region41
    $region40: #{lenet_forward.1} parent=1 // pred_region
      _
    $region41: #{lenet_forward.1} parent=1 // pred_fallthru
      _
    // Predicated region
    $region42: #{lenet_forward.1} parent=1 // pred_check
      _
    $region43: #{lenet_forward.1} parent=1 // pred_check_branch
      %62 = sbr.rel (0) target = $region45
    $region44: #{lenet_forward.1} parent=1 // pred_region
      _
    $region45: #{lenet_forward.1} parent=1 // pred_fallthru
      _
    // Predicated region
    $region46: #{lenet_forward.1} parent=1 // pred_check
      _
    $region47: #{lenet_forward.1} parent=1 // pred_check_branch
      %64 = sbr.rel (0) target = $region49
    $region48: #{lenet_forward.1} parent=1 // pred_region
      %66 = dma.done [#allocation6], 15360
    $region49: #{lenet_forward.1} parent=1 // pred_fallthru
      _
    // Predicated region
    $region50: #{lenet_forward.1} parent=1 // pred_check
      _
    $region51: #{lenet_forward.1} parent=1 // pred_check_branch
      %68 = sbr.rel (0) target = $region53
    $region52: #{lenet_forward.1} parent=1 // pred_region
      %70 = dma.done [#allocation9], 14080
    $region53: #{lenet_forward.1} parent=1 // pred_fallthru
      _
    %v71 = vld [vmem:[%s2] sm:$0x1]
    %v72 = vld [vmem:[%s0] sm:$0xff]
    %v73 = vld [vmem:[%s0 + $0x8] sm:$0xff]
    %v74 = vld [vmem:[%s0 + $0x10] sm:$0xff]
    %v75 = vld [vmem:[%s0 + $0x18] sm:$0xff]
    %v76 = vld [vmem:[%s0 + $0x20] sm:$0xff]
    %v77 = vld [vmem:[%s0 + $0x28] sm:$0xff]
    %v78 = vld [vmem:[%s0 + $0x30] sm:$0xff]
    %v79 = vld [vmem:[%s0 + $0x38] sm:$0xf]
    %v80 = vld [vmem:[#allocation5] sm:$0xff]
    %v81 = vld [vmem:[#allocation5 + $0x8] sm:$0xff]
    %v82 = vld [vmem:[#allocation5 + $0x10] sm:$0xff]
    %v83 = vld [vmem:[#allocation5 + $0x18] sm:$0xff]
    %v84 = vld [vmem:[#allocation5 + $0x20] sm:$0xff]
    %v85 = vld [vmem:[#allocation5 + $0x28] sm:$0xff]
    %v86 = vld [vmem:[#allocation5 + $0x30] sm:$0xff]
    %v87 = vld [vmem:[#allocation5 + $0x38] sm:$0xff]
    %v88 = vld [vmem:[#allocation5 + $0x40] sm:$0xff]
    %v89 = vld [vmem:[#allocation5 + $0x48] sm:$0xff]
    %v90 = vld [vmem:[#allocation5 + $0x50] sm:$0xff]
    %v91 = vld [vmem:[#allocation5 + $0x58] sm:$0xff]
    %v92 = vld [vmem:[#allocation5 + $0x60] sm:$0xff]
    %v93 = vld [vmem:[#allocation5 + $0x68] sm:$0xff]
    %v94 = vld [vmem:[#allocation5 + $0x70] sm:$0xff]
    %v95 = vld [vmem:[#allocation5 + $0x78] sm:$0xff]
    %v96 = vld [vmem:[#allocation5 + $0x80] sm:$0xff]
    %v97 = vld [vmem:[#allocation5 + $0x88] sm:$0xff]
    %v98 = vld [vmem:[#allocation5 + $0x90] sm:$0xff]
    %v99 = vld [vmem:[#allocation5 + $0x98] sm:$0xff]
    %v100 = vld [vmem:[#allocation5 + $0xa0] sm:$0xff]
    %v101 = vld [vmem:[#allocation5 + $0xa8] sm:$0xff]
    %v102 = vld [vmem:[#allocation5 + $0xb0] sm:$0xff]
    %v103 = vld [vmem:[#allocation5 + $0xb8] sm:$0xff]
    %v104 = vld [vmem:[%s0 + $0x1] sm:$0xff]
    %v105 = vld [vmem:[%s0 + $0x9] sm:$0xff]
    %v106 = vld [vmem:[%s0 + $0x11] sm:$0xff]
    %v107 = vld [vmem:[%s0 + $0x19] sm:$0xff]
    %v108 = vld [vmem:[%s0 + $0x21] sm:$0xff]
    %v109 = vld [vmem:[%s0 + $0x29] sm:$0xff]
    %v110 = vld [vmem:[%s0 + $0x31] sm:$0xff]
    %v111 = vld [vmem:[%s0 + $0x39] sm:$0xf]
    %s112 = scalar_lea.vmem [#allocation5], 192
    %v113 = vld [vmem:[%s112] sm:$0xff]
    %v114 = vld [vmem:[%s112 + $0x8] sm:$0xff]
    %v115 = vld [vmem:[%s112 + $0x10] sm:$0xff]
    %v116 = vld [vmem:[%s112 + $0x18] sm:$0xff]
    %v117 = vld [vmem:[%s112 + $0x20] sm:$0xff]
    %v118 = vld [vmem:[%s112 + $0x28] sm:$0xff]
    %v119 = vld [vmem:[%s112 + $0x30] sm:$0xff]
    %v120 = vld [vmem:[%s112 + $0x38] sm:$0xff]
    %v121 = vld [vmem:[%s112 + $0x40] sm:$0xff]
    %v122 = vld [vmem:[%s112 + $0x48] sm:$0xff]
    %v123 = vld [vmem:[%s112 + $0x50] sm:$0xff]
    %v124 = vld [vmem:[%s112 + $0x58] sm:$0xff]
    %v125 = vld [vmem:[%s112 + $0x60] sm:$0xff]
    %v126 = vld [vmem:[%s112 + $0x68] sm:$0xff]
    %v127 = vld [vmem:[%s112 + $0x70] sm:$0xff]
    %v128 = vld [vmem:[%s112 + $0x78] sm:$0xff]
    %v129 = vld [vmem:[%s112 + $0x80] sm:$0xff]
    %v130 = vld [vmem:[%s112 + $0x88] sm:$0xff]
    %v131 = vld [vmem:[%s112 + $0x90] sm:$0xff]
    %v132 = vld [vmem:[%s112 + $0x98] sm:$0xff]
    %v133 = vld [vmem:[%s112 + $0xa0] sm:$0xff]
    %v134 = vld [vmem:[%s112 + $0xa8] sm:$0xff]
    %v135 = vld [vmem:[%s112 + $0xb0] sm:$0xff]
    %v136 = vld [vmem:[%s112 + $0xb8] sm:$0xff]
    %vm137 = vcmask 785408
    %v139 = vsel %vm137, %v104, 0
    %v142 = vsel %vm137, %v105, 0
    %v145 = vsel %vm137, %v106, 0
    %v148 = vsel %vm137, %v107, 0
    %v151 = vsel %vm137, %v108, 0
    %v154 = vsel %vm137, %v109, 0
    %v157 = vsel %vm137, %v110, 0
    %v160 = vsel %vm137, %v111, 0
    %162 = vmatpush.msra.mxu0 0.0
    %163 = vmatpush.msra.mxu0 0.0
    %164 = vmatpush.msra.mxu0 0.0
    %165 = vmatpush.msra.mxu0 0.0
    %166 = vmatpush.msra.mxu0 %v135
    %167 = vmatpush.msra.mxu0 %v133
    %168 = vmatpush.msra.mxu0 %v131
    %169 = vmatpush.msra.mxu0 %v129
    %170 = vmatpush.msra.mxu0 %v127
    %171 = vmatpush.msra.mxu0 %v125
    %172 = vmatpush.msra.mxu0 %v123
    %173 = vmatpush.msra.mxu0 %v121
    %174 = vmatpush.msra.mxu0 %v119
    %175 = vmatpush.msra.mxu0 %v117
    %176 = vmatpush.msra.mxu0 %v115
    %177 = vmatpush.msra.mxu0 %v113
    %178 = vmatmul.f32.gmra.mxu0 %v139
    %v179 = vpop.f32.mrf.mxu0
    %v180 = vadd.f32 0.0, %v179
    %181 = vmatmul.f32.gmra.mxu0 %v142
    %v182 = vpop.f32.mrf.mxu0
    %v183 = vadd.f32 0.0, %v182
    %184 = vmatmul.f32.gmra.mxu0 %v145
    %v185 = vpop.f32.mrf.mxu0
    %v186 = vadd.f32 0.0, %v185
    %187 = vmatmul.f32.gmra.mxu0 %v148
    %v188 = vpop.f32.mrf.mxu0
    %v189 = vadd.f32 0.0, %v188
    %190 = vmatmul.f32.gmra.mxu0 %v151
    %v191 = vpop.f32.mrf.mxu0
    %v192 = vadd.f32 0.0, %v191
    %193 = vmatmul.f32.gmra.mxu0 %v154
    %v194 = vpop.f32.mrf.mxu0
    %v195 = vadd.f32 0.0, %v194
    %196 = vmatmul.f32.gmra.mxu0 %v157
    %v197 = vpop.f32.mrf.mxu0
    %v198 = vadd.f32 0.0, %v197
    %199 = vmatmul.f32.gmra.mxu0 %v160
    %v200 = vpop.f32.mrf.mxu0
    %v201 = vadd.f32 0.0, %v200
    %202 = vdwg.mxu0
    %203 = vmatpush.msra.mxu0 0.0
    %204 = vmatpush.msra.mxu0 0.0
    %205 = vmatpush.msra.mxu0 0.0
    %206 = vmatpush.msra.mxu0 0.0
    %207 = vmatpush.msra.mxu0 %v136
    %208 = vmatpush.msra.mxu0 %v134
    %209 = vmatpush.msra.mxu0 %v132
    %210 = vmatpush.msra.mxu0 %v130
    %211 = vmatpush.msra.mxu0 %v128
    %212 = vmatpush.msra.mxu0 %v126
    %213 = vmatpush.msra.mxu0 %v124
    %214 = vmatpush.msra.mxu0 %v122
    %215 = vmatpush.msra.mxu0 %v120
    %216 = vmatpush.msra.mxu0 %v118
    %217 = vmatpush.msra.mxu0 %v116
    %218 = vmatpush.msra.mxu0 %v114
    %219 = vmatmul.f32.gmra.mxu0 %v139
    %v220 = vpop.f32.mrf.mxu0
    %v221 = vadd.f32 0.0, %v220
    %222 = vmatmul.f32.gmra.mxu0 %v142
    %v223 = vpop.f32.mrf.mxu0
    %v224 = vadd.f32 0.0, %v223
    %225 = vmatmul.f32.gmra.mxu0 %v145
    %v226 = vpop.f32.mrf.mxu0
    %v227 = vadd.f32 0.0, %v226
    %228 = vmatmul.f32.gmra.mxu0 %v148
    %v229 = vpop.f32.mrf.mxu0
    %v230 = vadd.f32 0.0, %v229
    %231 = vmatmul.f32.gmra.mxu0 %v151
    %v232 = vpop.f32.mrf.mxu0
    %v233 = vadd.f32 0.0, %v232
    %234 = vmatmul.f32.gmra.mxu0 %v154
    %v235 = vpop.f32.mrf.mxu0
    %v236 = vadd.f32 0.0, %v235
    %237 = vmatmul.f32.gmra.mxu0 %v157
    %v238 = vpop.f32.mrf.mxu0
    %v239 = vadd.f32 0.0, %v238
    %240 = vmatmul.f32.gmra.mxu0 %v160
    %v241 = vpop.f32.mrf.mxu0
    %v242 = vadd.f32 0.0, %v241
    %243 = vdwg.mxu0
    %v245 = vsel %vm137, %v72, 0
    %v248 = vsel %vm137, %v73, 0
    %v251 = vsel %vm137, %v74, 0
    %v254 = vsel %vm137, %v75, 0
    %v257 = vsel %vm137, %v76, 0
    %v260 = vsel %vm137, %v77, 0
    %v263 = vsel %vm137, %v78, 0
    %v266 = vsel %vm137, %v79, 0
    %268 = vmatpush.msra.mxu0 0.0
    %269 = vmatpush.msra.mxu0 0.0
    %270 = vmatpush.msra.mxu0 0.0
    %271 = vmatpush.msra.mxu0 0.0
    %272 = vmatpush.msra.mxu0 %v102
    %273 = vmatpush.msra.mxu0 %v100
    %274 = vmatpush.msra.mxu0 %v98
    %275 = vmatpush.msra.mxu0 %v96
    %276 = vmatpush.msra.mxu0 %v94
    %277 = vmatpush.msra.mxu0 %v92
    %278 = vmatpush.msra.mxu0 %v90
    %279 = vmatpush.msra.mxu0 %v88
    %280 = vmatpush.msra.mxu0 %v86
    %281 = vmatpush.msra.mxu0 %v84
    %282 = vmatpush.msra.mxu0 %v82
    %283 = vmatpush.msra.mxu0 %v80
    %284 = vmatmul.f32.gmra.mxu0 %v245
    %v285 = vpop.f32.mrf.mxu0
    %v286 = vadd.f32 %v180, %v285
    %287 = vmatmul.f32.gmra.mxu0 %v248
    %v288 = vpop.f32.mrf.mxu0
    %v289 = vadd.f32 %v183, %v288
    %290 = vmatmul.f32.gmra.mxu0 %v251
    %v291 = vpop.f32.mrf.mxu0
    %v292 = vadd.f32 %v186, %v291
    %293 = vmatmul.f32.gmra.mxu0 %v254
    %v294 = vpop.f32.mrf.mxu0
    %v295 = vadd.f32 %v189, %v294
    %296 = vmatmul.f32.gmra.mxu0 %v257
    %v297 = vpop.f32.mrf.mxu0
    %v298 = vadd.f32 %v192, %v297
    %299 = vmatmul.f32.gmra.mxu0 %v260
    %v300 = vpop.f32.mrf.mxu0
    %v301 = vadd.f32 %v195, %v300
    %302 = vmatmul.f32.gmra.mxu0 %v263
    %v303 = vpop.f32.mrf.mxu0
    %v304 = vadd.f32 %v198, %v303
    %305 = vmatmul.f32.gmra.mxu0 %v266
    %v306 = vpop.f32.mrf.mxu0
    %v307 = vadd.f32 %v201, %v306
    %308 = vdwg.mxu0
    %309 = vmatpush.msra.mxu0 0.0
    %310 = vmatpush.msra.mxu0 0.0
    %311 = vmatpush.msra.mxu0 0.0
    %312 = vmatpush.msra.mxu0 0.0
    %313 = vmatpush.msra.mxu0 %v103
    %314 = vmatpush.msra.mxu0 %v101
    %315 = vmatpush.msra.mxu0 %v99
    %316 = vmatpush.msra.mxu0 %v97
    %317 = vmatpush.msra.mxu0 %v95
    %318 = vmatpush.msra.mxu0 %v93
    %319 = vmatpush.msra.mxu0 %v91
    %320 = vmatpush.msra.mxu0 %v89
    %321 = vmatpush.msra.mxu0 %v87
    %322 = vmatpush.msra.mxu0 %v85
    %323 = vmatpush.msra.mxu0 %v83
    %324 = vmatpush.msra.mxu0 %v81
    %325 = vmatmul.f32.gmra.mxu0 %v245
    %v326 = vpop.f32.mrf.mxu0
    %v327 = vadd.f32 %v221, %v326
    %328 = vmatmul.f32.gmra.mxu0 %v248
    %v329 = vpop.f32.mrf.mxu0
    %v330 = vadd.f32 %v224, %v329
    %331 = vmatmul.f32.gmra.mxu0 %v251
    %v332 = vpop.f32.mrf.mxu0
    %v333 = vadd.f32 %v227, %v332
    %334 = vmatmul.f32.gmra.mxu0 %v254
    %v335 = vpop.f32.mrf.mxu0
    %v336 = vadd.f32 %v230, %v335
    %337 = vmatmul.f32.gmra.mxu0 %v257
    %v338 = vpop.f32.mrf.mxu0
    %v339 = vadd.f32 %v233, %v338
    %340 = vmatmul.f32.gmra.mxu0 %v260
    %v341 = vpop.f32.mrf.mxu0
    %v342 = vadd.f32 %v236, %v341
    %343 = vmatmul.f32.gmra.mxu0 %v263
    %v344 = vpop.f32.mrf.mxu0
    %v345 = vadd.f32 %v239, %v344
    %346 = vmatmul.f32.gmra.mxu0 %v266
    %v347 = vpop.f32.mrf.mxu0
    %v348 = vadd.f32 %v242, %v347
    %349 = vdwg.mxu0
    %v350 = vld [vmem:[%s0 + $0x2] sm:$0xff]
    %v351 = vld [vmem:[%s0 + $0xa] sm:$0xff]
    %v352 = vld [vmem:[%s0 + $0x12] sm:$0xff]
    %v353 = vld [vmem:[%s0 + $0x1a] sm:$0xff]
    %v354 = vld [vmem:[%s0 + $0x22] sm:$0xff]
    %v355 = vld [vmem:[%s0 + $0x2a] sm:$0xff]
    %v356 = vld [vmem:[%s0 + $0x32] sm:$0xff]
    %v357 = vld [vmem:[%s0 + $0x3a] sm:$0xf]
    %s358 = scalar_lea.vmem [#allocation5], 384
    %v359 = vld [vmem:[%s358] sm:$0xff]
    %v360 = vld [vmem:[%s358 + $0x8] sm:$0xff]
    %v361 = vld [vmem:[%s358 + $0x10] sm:$0xff]
    %v362 = vld [vmem:[%s358 + $0x18] sm:$0xff]
    %v363 = vld [vmem:[%s358 + $0x20] sm:$0xff]
    %v364 = vld [vmem:[%s358 + $0x28] sm:$0xff]
    %v365 = vld [vmem:[%s358 + $0x30] sm:$0xff]
    %v366 = vld [vmem:[%s358 + $0x38] sm:$0xff]
    %v367 = vld [vmem:[%s358 + $0x40] sm:$0xff]
    %v368 = vld [vmem:[%s358 + $0x48] sm:$0xff]
    %v369 = vld [vmem:[%s358 + $0x50] sm:$0xff]
    %v370 = vld [vmem:[%s358 + $0x58] sm:$0xff]
    %v371 = vld [vmem:[%s358 + $0x60] sm:$0xff]
    %v372 = vld [vmem:[%s358 + $0x68] sm:$0xff]
    %v373 = vld [vmem:[%s358 + $0x70] sm:$0xff]
    %v374 = vld [vmem:[%s358 + $0x78] sm:$0xff]
    %v375 = vld [vmem:[%s358 + $0x80] sm:$0xff]
    %v376 = vld [vmem:[%s358 + $0x88] sm:$0xff]
    %v377 = vld [vmem:[%s358 + $0x90] sm:$0xff]
    %v378 = vld [vmem:[%s358 + $0x98] sm:$0xff]
    %v379 = vld [vmem:[%s358 + $0xa0] sm:$0xff]
    %v380 = vld [vmem:[%s358 + $0xa8] sm:$0xff]
    %v381 = vld [vmem:[%s358 + $0xb0] sm:$0xff]
    %v382 = vld [vmem:[%s358 + $0xb8] sm:$0xff]
    %v384 = vsel %vm137, %v350, 0
    %v387 = vsel %vm137, %v351, 0
    %v390 = vsel %vm137, %v352, 0
    %v393 = vsel %vm137, %v353, 0
    %v396 = vsel %vm137, %v354, 0
    %v399 = vsel %vm137, %v355, 0
    %v402 = vsel %vm137, %v356, 0
    %v405 = vsel %vm137, %v357, 0
    %407 = vmatpush.msra.mxu0 0.0
    %408 = vmatpush.msra.mxu0 0.0
    %409 = vmatpush.msra.mxu0 0.0
    %410 = vmatpush.msra.mxu0 0.0
    %411 = vmatpush.msra.mxu0 %v381
    %412 = vmatpush.msra.mxu0 %v379
    %413 = vmatpush.msra.mxu0 %v377
    %414 = vmatpush.msra.mxu0 %v375
    %415 = vmatpush.msra.mxu0 %v373
    %416 = vmatpush.msra.mxu0 %v371
    %417 = vmatpush.msra.mxu0 %v369
    %418 = vmatpush.msra.mxu0 %v367
    %419 = vmatpush.msra.mxu0 %v365
    %420 = vmatpush.msra.mxu0 %v363
    %421 = vmatpush.msra.mxu0 %v361
    %422 = vmatpush.msra.mxu0 %v359
    %423 = vmatmul.f32.gmra.mxu0 %v384
    %v424 = vpop.f32.mrf.mxu0
    %v425 = vadd.f32 0.0, %v424
    %426 = vmatmul.f32.gmra.mxu0 %v387
    %v427 = vpop.f32.mrf.mxu0
    %v428 = vadd.f32 0.0, %v427
    %429 = vmatmul.f32.gmra.mxu0 %v390
    %v430 = vpop.f32.mrf.mxu0
    %v431 = vadd.f32 0.0, %v430
    %432 = vmatmul.f32.gmra.mxu0 %v393
    %v433 = vpop.f32.mrf.mxu0
    %v434 = vadd.f32 0.0, %v433
    %435 = vmatmul.f32.gmra.mxu0 %v396
    %v436 = vpop.f32.mrf.mxu0
    %v437 = vadd.f32 0.0, %v436
    %438 = vmatmul.f32.gmra.mxu0 %v399
    %v439 = vpop.f32.mrf.mxu0
    %v440 = vadd.f32 0.0, %v439
    %441 = vmatmul.f32.gmra.mxu0 %v402
    %v442 = vpop.f32.mrf.mxu0
    %v443 = vadd.f32 0.0, %v442
    %444 = vmatmul.f32.gmra.mxu0 %v405
    %v445 = vpop.f32.mrf.mxu0
    %v446 = vadd.f32 0.0, %v445
    %447 = vdwg.mxu0
    %448 = vmatpush.msra.mxu0 0.0
    %449 = vmatpush.msra.mxu0 0.0
    %450 = vmatpush.msra.mxu0 0.0
    %451 = vmatpush.msra.mxu0 0.0
    %452 = vmatpush.msra.mxu0 %v382
    %453 = vmatpush.msra.mxu0 %v380
    %454 = vmatpush.msra.mxu0 %v378
    %455 = vmatpush.msra.mxu0 %v376
    %456 = vmatpush.msra.mxu0 %v374
    %457 = vmatpush.msra.mxu0 %v372
    %458 = vmatpush.msra.mxu0 %v370
    %459 = vmatpush.msra.mxu0 %v368
    %460 = vmatpush.msra.mxu0 %v366
    %461 = vmatpush.msra.mxu0 %v364
    %462 = vmatpush.msra.mxu0 %v362
    %463 = vmatpush.msra.mxu0 %v360
    %464 = vmatmul.f32.gmra.mxu0 %v384
    %v465 = vpop.f32.mrf.mxu0
    %v466 = vadd.f32 0.0, %v465
    %467 = vmatmul.f32.gmra.mxu0 %v387
    %v468 = vpop.f32.mrf.mxu0
    %v469 = vadd.f32 0.0, %v468
    %470 = vmatmul.f32.gmra.mxu0 %v390
    %v471 = vpop.f32.mrf.mxu0
    %v472 = vadd.f32 0.0, %v471
    %473 = vmatmul.f32.gmra.mxu0 %v393
    %v474 = vpop.f32.mrf.mxu0
    %v475 = vadd.f32 0.0, %v474
    %476 = vmatmul.f32.gmra.mxu0 %v396
    %v477 = vpop.f32.mrf.mxu0
    %v478 = vadd.f32 0.0, %v477
    %479 = vmatmul.f32.gmra.mxu0 %v399
    %v480 = vpop.f32.mrf.mxu0
    %v481 = vadd.f32 0.0, %v480
    %482 = vmatmul.f32.gmra.mxu0 %v402
    %v483 = vpop.f32.mrf.mxu0
    %v484 = vadd.f32 0.0, %v483
    %485 = vmatmul.f32.gmra.mxu0 %v405
    %v486 = vpop.f32.mrf.mxu0
    %v487 = vadd.f32 0.0, %v486
    %488 = vdwg.mxu0
    %v489 = vadd.f32 %v286, %v425
    %v490 = vadd.f32 %v327, %v466
    %v491 = vadd.f32 %v289, %v428
    %v492 = vadd.f32 %v330, %v469
    %v493 = vadd.f32 %v292, %v431
    %v494 = vadd.f32 %v333, %v472
    %v495 = vadd.f32 %v295, %v434
    %v496 = vadd.f32 %v336, %v475
    %v497 = vadd.f32 %v298, %v437
    %v498 = vadd.f32 %v339, %v478
    %v499 = vadd.f32 %v301, %v440
    %v500 = vadd.f32 %v342, %v481
    %v501 = vadd.f32 %v304, %v443
    %v502 = vadd.f32 %v345, %v484
    %v503 = vadd.f32 %v307, %v446
    %v504 = vadd.f32 %v348, %v487
    %v505 = vld [vmem:[%s0 + $0x3] sm:$0xff]
    %v506 = vld [vmem:[%s0 + $0xb] sm:$0xff]
    %v507 = vld [vmem:[%s0 + $0x13] sm:$0xff]
    %v508 = vld [vmem:[%s0 + $0x1b] sm:$0xff]
    %v509 = vld [vmem:[%s0 + $0x23] sm:$0xff]
    %v510 = vld [vmem:[%s0 + $0x2b] sm:$0xff]
    %v511 = vld [vmem:[%s0 + $0x33] sm:$0xff]
    %v512 = vld [vmem:[%s0 + $0x3b] sm:$0xf]
    %s513 = scalar_lea.vmem [#allocation5], 576
    %v514 = vld [vmem:[%s513] sm:$0xff]
    %v515 = vld [vmem:[%s513 + $0x8] sm:$0xff]
    %v516 = vld [vmem:[%s513 + $0x10] sm:$0xff]
    %v517 = vld [vmem:[%s513 + $0x18] sm:$0xff]
    %v518 = vld [vmem:[%s513 + $0x20] sm:$0xff]
    %v519 = vld [vmem:[%s513 + $0x28] sm:$0xff]
    %v520 = vld [vmem:[%s513 + $0x30] sm:$0xff]
    %v521 = vld [vmem:[%s513 + $0x38] sm:$0xff]
    %v522 = vld [vmem:[%s513 + $0x40] sm:$0xff]
    %v523 = vld [vmem:[%s513 + $0x48] sm:$0xff]
    %v524 = vld [vmem:[%s513 + $0x50] sm:$0xff]
    %v525 = vld [vmem:[%s513 + $0x58] sm:$0xff]
    %v526 = vld [vmem:[%s513 + $0x60] sm:$0xff]
    %v527 = vld [vmem:[%s513 + $0x68] sm:$0xff]
    %v528 = vld [vmem:[%s513 + $0x70] sm:$0xff]
    %v529 = vld [vmem:[%s513 + $0x78] sm:$0xff]
    %v530 = vld [vmem:[%s513 + $0x80] sm:$0xff]
    %v531 = vld [vmem:[%s513 + $0x88] sm:$0xff]
    %v532 = vld [vmem:[%s513 + $0x90] sm:$0xff]
    %v533 = vld [vmem:[%s513 + $0x98] sm:$0xff]
    %v534 = vld [vmem:[%s513 + $0xa0] sm:$0xff]
    %v535 = vld [vmem:[%s513 + $0xa8] sm:$0xff]
    %v536 = vld [vmem:[%s513 + $0xb0] sm:$0xff]
    %v537 = vld [vmem:[%s513 + $0xb8] sm:$0xff]
    %v539 = vsel %vm137, %v505, 0
    %v542 = vsel %vm137, %v506, 0
    %v545 = vsel %vm137, %v507, 0
    %v548 = vsel %vm137, %v508, 0
    %v551 = vsel %vm137, %v509, 0
    %v554 = vsel %vm137, %v510, 0
    %v557 = vsel %vm137, %v511, 0
    %v560 = vsel %vm137, %v512, 0
    %562 = vmatpush.msra.mxu0 0.0
    %563 = vmatpush.msra.mxu0 0.0
    %564 = vmatpush.msra.mxu0 0.0
    %565 = vmatpush.msra.mxu0 0.0
    %566 = vmatpush.msra.mxu0 %v536
    %567 = vmatpush.msra.mxu0 %v534
    %568 = vmatpush.msra.mxu0 %v532
    %569 = vmatpush.msra.mxu0 %v530
    %570 = vmatpush.msra.mxu0 %v528
    %571 = vmatpush.msra.mxu0 %v526
    %572 = vmatpush.msra.mxu0 %v524
    %573 = vmatpush.msra.mxu0 %v522
    %574 = vmatpush.msra.mxu0 %v520
    %575 = vmatpush.msra.mxu0 %v518
    %576 = vmatpush.msra.mxu0 %v516
    %577 = vmatpush.msra.mxu0 %v514
    %578 = vmatmul.f32.gmra.mxu0 %v539
    %v579 = vpop.f32.mrf.mxu0
    %v580 = vadd.f32 0.0, %v579
    %581 = vmatmul.f32.gmra.mxu0 %v542
    %v582 = vpop.f32.mrf.mxu0
    %v583 = vadd.f32 0.0, %v582
    %584 = vmatmul.f32.gmra.mxu0 %v545
    %v585 = vpop.f32.mrf.mxu0
    %v586 = vadd.f32 0.0, %v585
    %587 = vmatmul.f32.gmra.mxu0 %v548
    %v588 = vpop.f32.mrf.mxu0
    %v589 = vadd.f32 0.0, %v588
    %590 = vmatmul.f32.gmra.mxu0 %v551
    %v591 = vpop.f32.mrf.mxu0
    %v592 = vadd.f32 0.0, %v591
    %593 = vmatmul.f32.gmra.mxu0 %v554
    %v594 = vpop.f32.mrf.mxu0
    %v595 = vadd.f32 0.0, %v594
    %596 = vmatmul.f32.gmra.mxu0 %v557
    %v597 = vpop.f32.mrf.mxu0
    %v598 = vadd.f32 0.0, %v597
    %599 = vmatmul.f32.gmra.mxu0 %v560
    %v600 = vpop.f32.mrf.mxu0
    %v601 = vadd.f32 0.0, %v600
    %602 = vdwg.mxu0
    %603 = vmatpush.msra.mxu0 0.0
    %604 = vmatpush.msra.mxu0 0.0
    %605 = vmatpush.msra.mxu0 0.0
    %606 = vmatpush.msra.mxu0 0.0
    %607 = vmatpush.msra.mxu0 %v537
    %608 = vmatpush.msra.mxu0 %v535
    %609 = vmatpush.msra.mxu0 %v533
    %610 = vmatpush.msra.mxu0 %v531
    %611 = vmatpush.msra.mxu0 %v529
    %612 = vmatpush.msra.mxu0 %v527
    %613 = vmatpush.msra.mxu0 %v525
    %614 = vmatpush.msra.mxu0 %v523
    %615 = vmatpush.msra.mxu0 %v521
    %616 = vmatpush.msra.mxu0 %v519
    %617 = vmatpush.msra.mxu0 %v517
    %618 = vmatpush.msra.mxu0 %v515
    %619 = vmatmul.f32.gmra.mxu0 %v539
    %v620 = vpop.f32.mrf.mxu0
    %v621 = vadd.f32 0.0, %v620
    %622 = vmatmul.f32.gmra.mxu0 %v542
    %v623 = vpop.f32.mrf.mxu0
    %v624 = vadd.f32 0.0, %v623
    %625 = vmatmul.f32.gmra.mxu0 %v545
    %v626 = vpop.f32.mrf.mxu0
    %v627 = vadd.f32 0.0, %v626
    %628 = vmatmul.f32.gmra.mxu0 %v548
    %v629 = vpop.f32.mrf.mxu0
    %v630 = vadd.f32 0.0, %v629
    %631 = vmatmul.f32.gmra.mxu0 %v551
    %v632 = vpop.f32.mrf.mxu0
    %v633 = vadd.f32 0.0, %v632
    %634 = vmatmul.f32.gmra.mxu0 %v554
    %v635 = vpop.f32.mrf.mxu0
    %v636 = vadd.f32 0.0, %v635
    %637 = vmatmul.f32.gmra.mxu0 %v557
    %v638 = vpop.f32.mrf.mxu0
    %v639 = vadd.f32 0.0, %v638
    %640 = vmatmul.f32.gmra.mxu0 %v560
    %v641 = vpop.f32.mrf.mxu0
    %v642 = vadd.f32 0.0, %v641
    %643 = vdwg.mxu0
    %v644 = vadd.f32 %v489, %v580
    %v645 = vadd.f32 %v490, %v621
    %v646 = vadd.f32 %v491, %v583
    %v647 = vadd.f32 %v492, %v624
    %v648 = vadd.f32 %v493, %v586
    %v649 = vadd.f32 %v494, %v627
    %v650 = vadd.f32 %v495, %v589
    %v651 = vadd.f32 %v496, %v630
    %v652 = vadd.f32 %v497, %v592
    %v653 = vadd.f32 %v498, %v633
    %v654 = vadd.f32 %v499, %v595
    %v655 = vadd.f32 %v500, %v636
    %v656 = vadd.f32 %v501, %v598
    %v657 = vadd.f32 %v502, %v639
    %v658 = vadd.f32 %v503, %v601
    %v659 = vadd.f32 %v504, %v642
    %v660 = vld [vmem:[%s0 + $0x4] sm:$0xff]
    %v661 = vld [vmem:[%s0 + $0xc] sm:$0xff]
    %v662 = vld [vmem:[%s0 + $0x14] sm:$0xff]
    %v663 = vld [vmem:[%s0 + $0x1c] sm:$0xff]
    %v664 = vld [vmem:[%s0 + $0x24] sm:$0xff]
    %v665 = vld [vmem:[%s0 + $0x2c] sm:$0xff]
    %v666 = vld [vmem:[%s0 + $0x34] sm:$0xff]
    %v667 = vld [vmem:[%s0 + $0x3c] sm:$0xf]
    %s668 = scalar_lea.vmem [#allocation5], 768
    %v669 = vld [vmem:[%s668] sm:$0xff]
    %v670 = vld [vmem:[%s668 + $0x8] sm:$0xff]
    %v671 = vld [vmem:[%s668 + $0x10] sm:$0xff]
    %v672 = vld [vmem:[%s668 + $0x18] sm:$0xff]
    %v673 = vld [vmem:[%s668 + $0x20] sm:$0xff]
    %v674 = vld [vmem:[%s668 + $0x28] sm:$0xff]
    %v675 = vld [vmem:[%s668 + $0x30] sm:$0xff]
    %v676 = vld [vmem:[%s668 + $0x38] sm:$0xff]
    %v677 = vld [vmem:[%s668 + $0x40] sm:$0xff]
    %v678 = vld [vmem:[%s668 + $0x48] sm:$0xff]
    %v679 = vld [vmem:[%s668 + $0x50] sm:$0xff]
    %v680 = vld [vmem:[%s668 + $0x58] sm:$0xff]
    %v681 = vld [vmem:[%s668 + $0x60] sm:$0xff]
    %v682 = vld [vmem:[%s668 + $0x68] sm:$0xff]
    %v683 = vld [vmem:[%s668 + $0x70] sm:$0xff]
    %v684 = vld [vmem:[%s668 + $0x78] sm:$0xff]
    %v685 = vld [vmem:[%s668 + $0x80] sm:$0xff]
    %v686 = vld [vmem:[%s668 + $0x88] sm:$0xff]
    %v687 = vld [vmem:[%s668 + $0x90] sm:$0xff]
    %v688 = vld [vmem:[%s668 + $0x98] sm:$0xff]
    %v689 = vld [vmem:[%s668 + $0xa0] sm:$0xff]
    %v690 = vld [vmem:[%s668 + $0xa8] sm:$0xff]
    %v691 = vld [vmem:[%s668 + $0xb0] sm:$0xff]
    %v692 = vld [vmem:[%s668 + $0xb8] sm:$0xff]
    %v694 = vsel %vm137, %v660, 0
    %v697 = vsel %vm137, %v661, 0
    %v700 = vsel %vm137, %v662, 0
    %v703 = vsel %vm137, %v663, 0
    %v706 = vsel %vm137, %v664, 0
    %v709 = vsel %vm137, %v665, 0
    %v712 = vsel %vm137, %v666, 0
    %v715 = vsel %vm137, %v667, 0
    %717 = vmatpush.msra.mxu0 0.0
    %718 = vmatpush.msra.mxu0 0.0
    %719 = vmatpush.msra.mxu0 0.0
    %720 = vmatpush.msra.mxu0 0.0
    %721 = vmatpush.msra.mxu0 %v691
    %722 = vmatpush.msra.mxu0 %v689
    %723 = vmatpush.msra.mxu0 %v687
    %724 = vmatpush.msra.mxu0 %v685
    %725 = vmatpush.msra.mxu0 %v683
    %726 = vmatpush.msra.mxu0 %v681
    %727 = vmatpush.msra.mxu0 %v679
    %728 = vmatpush.msra.mxu0 %v677
    %729 = vmatpush.msra.mxu0 %v675
    %730 = vmatpush.msra.mxu0 %v673
    %731 = vmatpush.msra.mxu0 %v671
    %732 = vmatpush.msra.mxu0 %v669
    %733 = vmatmul.f32.gmra.mxu0 %v694
    %v734 = vpop.f32.mrf.mxu0
    %v735 = vadd.f32 0.0, %v734
    %736 = vmatmul.f32.gmra.mxu0 %v697
    %v737 = vpop.f32.mrf.mxu0
    %v738 = vadd.f32 0.0, %v737
    %739 = vmatmul.f32.gmra.mxu0 %v700
    %v740 = vpop.f32.mrf.mxu0
    %v741 = vadd.f32 0.0, %v740
    %742 = vmatmul.f32.gmra.mxu0 %v703
    %v743 = vpop.f32.mrf.mxu0
    %v744 = vadd.f32 0.0, %v743
    %745 = vmatmul.f32.gmra.mxu0 %v706
    %v746 = vpop.f32.mrf.mxu0
    %v747 = vadd.f32 0.0, %v746
    %748 = vmatmul.f32.gmra.mxu0 %v709
    %v749 = vpop.f32.mrf.mxu0
    %v750 = vadd.f32 0.0, %v749
    %751 = vmatmul.f32.gmra.mxu0 %v712
    %v752 = vpop.f32.mrf.mxu0
    %v753 = vadd.f32 0.0, %v752
    %754 = vmatmul.f32.gmra.mxu0 %v715
    %v755 = vpop.f32.mrf.mxu0
    %v756 = vadd.f32 0.0, %v755
    %757 = vdwg.mxu0
    %758 = vmatpush.msra.mxu0 0.0
    %759 = vmatpush.msra.mxu0 0.0
    %760 = vmatpush.msra.mxu0 0.0
    %761 = vmatpush.msra.mxu0 0.0
    %762 = vmatpush.msra.mxu0 %v692
    %763 = vmatpush.msra.mxu0 %v690
    %764 = vmatpush.msra.mxu0 %v688
    %765 = vmatpush.msra.mxu0 %v686
    %766 = vmatpush.msra.mxu0 %v684
    %767 = vmatpush.msra.mxu0 %v682
    %768 = vmatpush.msra.mxu0 %v680
    %769 = vmatpush.msra.mxu0 %v678
    %770 = vmatpush.msra.mxu0 %v676
    %771 = vmatpush.msra.mxu0 %v674
    %772 = vmatpush.msra.mxu0 %v672
    %773 = vmatpush.msra.mxu0 %v670
    %774 = vmatmul.f32.gmra.mxu0 %v694
    %v775 = vpop.f32.mrf.mxu0
    %v776 = vadd.f32 0.0, %v775
    %777 = vmatmul.f32.gmra.mxu0 %v697
    %v778 = vpop.f32.mrf.mxu0
    %v779 = vadd.f32 0.0, %v778
    %780 = vmatmul.f32.gmra.mxu0 %v700
    %v781 = vpop.f32.mrf.mxu0
    %v782 = vadd.f32 0.0, %v781
    %783 = vmatmul.f32.gmra.mxu0 %v703
    %v784 = vpop.f32.mrf.mxu0
    %v785 = vadd.f32 0.0, %v784
    %786 = vmatmul.f32.gmra.mxu0 %v706
    %v787 = vpop.f32.mrf.mxu0
    %v788 = vadd.f32 0.0, %v787
    %789 = vmatmul.f32.gmra.mxu0 %v709
    %v790 = vpop.f32.mrf.mxu0
    %v791 = vadd.f32 0.0, %v790
    %792 = vmatmul.f32.gmra.mxu0 %v712
    %v793 = vpop.f32.mrf.mxu0
    %v794 = vadd.f32 0.0, %v793
    %795 = vmatmul.f32.gmra.mxu0 %v715
    %v796 = vpop.f32.mrf.mxu0
    %v797 = vadd.f32 0.0, %v796
    %798 = vdwg.mxu0
    %v799 = vadd.f32 %v644, %v735
    %v800 = vadd.f32 %v645, %v776
    %v801 = vadd.f32 %v646, %v738
    %v802 = vadd.f32 %v647, %v779
    %v803 = vadd.f32 %v648, %v741
    %v804 = vadd.f32 %v649, %v782
    %v805 = vadd.f32 %v650, %v744
    %v806 = vadd.f32 %v651, %v785
    %v807 = vadd.f32 %v652, %v747
    %v808 = vadd.f32 %v653, %v788
    %v809 = vadd.f32 %v654, %v750
    %v810 = vadd.f32 %v655, %v791
    %v811 = vadd.f32 %v656, %v753
    %v812 = vadd.f32 %v657, %v794
    %v813 = vadd.f32 %v658, %v756
    %v814 = vadd.f32 %v659, %v797
    %v815 = vmax.f32 %v799, %v800
    %v816 = vmax.f32 %v801, %v802
    %v817 = vmax.f32 %v803, %v804
    %v818 = vmax.f32 %v805, %v806
    %v819 = vmax.f32 %v807, %v808
    %v820 = vmax.f32 %v809, %v810
    %v821 = vmax.f32 %v811, %v812
    %v822 = vmax.f32 %v813, %v814
    %v824 = vperm.slane %v71, 0
    %v826 = vadd.f32 %v815, %v824
    %v827 = vadd.f32 %v816, %v824
    %v828 = vadd.f32 %v817, %v824
    %v829 = vadd.f32 %v818, %v824
    %v830 = vadd.f32 %v819, %v824
    %v831 = vadd.f32 %v820, %v824
    %v832 = vadd.f32 %v821, %v824
    %v833 = vadd.f32 %v822, %v824
    %v834 = vmax.f32 %v826, 0.0
    %v835 = vmax.f32 %v827, 0.0
    %v836 = vmax.f32 %v828, 0.0
    %v837 = vmax.f32 %v829, 0.0
    %v838 = vmax.f32 %v830, 0.0
    %v839 = vmax.f32 %v831, 0.0
    %v840 = vmax.f32 %v832, 0.0
    %v841 = vmax.f32 %v833, 0.0
    %vm842 = vcmask 687104
    %843 = vst.msk [vmem:[#allocation2] sm:$0xff] %vm842, %v834
    %844 = vst.msk [vmem:[#allocation2 + $0x8] sm:$0xff] %vm842, %v835
    %845 = vst.msk [vmem:[#allocation2 + $0x10] sm:$0xff] %vm842, %v836
    %846 = vst.msk [vmem:[#allocation2 + $0x18] sm:$0xff] %vm842, %v837
    %847 = vst.msk [vmem:[#allocation2 + $0x20] sm:$0xff] %vm842, %v838
    %848 = vst.msk [vmem:[#allocation2 + $0x28] sm:$0xff] %vm842, %v839
    %849 = vst.msk [vmem:[#allocation2 + $0x30] sm:$0xff] %vm842, %v840
    %vm850 = vcmask 683008
    %851 = vst.msk [vmem:[#allocation2 + $0x38] sm:$0xf] %vm850, %v841
    %852 = vst.msk [vmem:[#allocation2 + $0x3c] sm:$0xf] %vm850, 0.0
    %v853 = vld [vmem:[#allocation2] ss:$2 sm:$0xff]
    %s854 = scalar_lea.vmem [#allocation2], 16
    %v855 = vld [vmem:[%s854] ss:$2 sm:$0xff]
    %s856 = scalar_lea.vmem [#allocation2], 32
    %v857 = vld [vmem:[%s856] ss:$2 sm:$0xff]
    %s858 = scalar_lea.vmem [#allocation2], 48
    %v859 = vld [vmem:[%s858] ss:$2 sm:$0xff]
    %s860 = scalar_lea.vmem [#allocation2], 1
    %v861 = vld [vmem:[%s860] ss:$2 sm:$0xff]
    %s862 = scalar_lea.vmem [#allocation2], 17
    %v863 = vld [vmem:[%s862] ss:$2 sm:$0xff]
    %s864 = scalar_lea.vmem [#allocation2], 33
    %v865 = vld [vmem:[%s864] ss:$2 sm:$0xff]
    %s866 = scalar_lea.vmem [#allocation2], 49
    %v867 = vld [vmem:[%s866] ss:$2 sm:$0xff]
    %v868 = vmax.f32 %v853, %v861
    %v869 = vmax.f32 %v855, %v863
    %v870 = vmax.f32 %v857, %v865
    %v871 = vmax.f32 %v859, %v867
    %872 = vst.msk [vmem:[#allocation3] sm:$0xff] %vm842, %v868
    %873 = vst.msk [vmem:[#allocation3 + $0x8] sm:$0xff] %vm842, %v869
    %874 = vst.msk [vmem:[#allocation3 + $0x10] sm:$0xff] %vm842, %v870
    %875 = vst.msk [vmem:[#allocation3 + $0x18] sm:$0xff] %vm842, %v871
    %v876 = vld [vmem:[%s4] sm:$0x1]
    %v877 = vld [vmem:[#allocation3] sm:$0xff]
    %v878 = vld [vmem:[#allocation3 + $0x8] sm:$0xff]
    %v879 = vld [vmem:[#allocation3 + $0x10] sm:$0xff]
    %v880 = vld [vmem:[#allocation3 + $0x18] sm:$0xf]
    %v881 = vld [vmem:[#allocation8] sm:$0xff]
    %v882 = vld [vmem:[#allocation8 + $0x8] sm:$0xff]
    %v883 = vld [vmem:[#allocation8 + $0x10] sm:$0xff]
    %v884 = vld [vmem:[#allocation8 + $0x18] sm:$0xff]
    %v885 = vld [vmem:[#allocation8 + $0x20] sm:$0xff]
    %v886 = vld [vmem:[#allocation8 + $0x28] sm:$0xff]
    %v887 = vld [vmem:[#allocation8 + $0x30] sm:$0xff]
    %v888 = vld [vmem:[#allocation8 + $0x38] sm:$0xff]
    %v889 = vld [vmem:[#allocation8 + $0x40] sm:$0xff]
    %v890 = vld [vmem:[#allocation8 + $0x48] sm:$0xff]
    %v891 = vld [vmem:[#allocation8 + $0x50] sm:$0xff]
    %v892 = vld [vmem:[#allocation8 + $0x58] sm:$0xff]
    %v893 = vld [vmem:[#allocation8 + $0x60] sm:$0xff]
    %v894 = vld [vmem:[#allocation8 + $0x68] sm:$0xff]
    %v895 = vld [vmem:[#allocation8 + $0x70] sm:$0xff]
    %v896 = vld [vmem:[#allocation8 + $0x78] sm:$0xff]
    %v897 = vld [vmem:[#allocation8 + $0x80] sm:$0xff]
    %v898 = vld [vmem:[#allocation8 + $0x88] sm:$0xff]
    %v899 = vld [vmem:[#allocation8 + $0x90] sm:$0xff]
    %v900 = vld [vmem:[#allocation8 + $0x98] sm:$0xff]
    %v901 = vld [vmem:[#allocation8 + $0xa0] sm:$0xf]
    %v902 = vld [vmem:[#allocation8 + $0xa8] sm:$0xf]
    %v903 = vld [vmem:[#allocation3 + $0x1] sm:$0xff]
    %v904 = vld [vmem:[#allocation3 + $0x9] sm:$0xff]
    %v905 = vld [vmem:[#allocation3 + $0x11] sm:$0xff]
    %v906 = vld [vmem:[#allocation3 + $0x19] sm:$0xf]
    %s907 = scalar_lea.vmem [#allocation8], 176
    %v908 = vld [vmem:[%s907] sm:$0xff]
    %v909 = vld [vmem:[%s907 + $0x8] sm:$0xff]
    %v910 = vld [vmem:[%s907 + $0x10] sm:$0xff]
    %v911 = vld [vmem:[%s907 + $0x18] sm:$0xff]
    %v912 = vld [vmem:[%s907 + $0x20] sm:$0xff]
    %v913 = vld [vmem:[%s907 + $0x28] sm:$0xff]
    %v914 = vld [vmem:[%s907 + $0x30] sm:$0xff]
    %v915 = vld [vmem:[%s907 + $0x38] sm:$0xff]
    %v916 = vld [vmem:[%s907 + $0x40] sm:$0xff]
    %v917 = vld [vmem:[%s907 + $0x48] sm:$0xff]
    %v918 = vld [vmem:[%s907 + $0x50] sm:$0xff]
    %v919 = vld [vmem:[%s907 + $0x58] sm:$0xff]
    %v920 = vld [vmem:[%s907 + $0x60] sm:$0xff]
    %v921 = vld [vmem:[%s907 + $0x68] sm:$0xff]
    %v922 = vld [vmem:[%s907 + $0x70] sm:$0xff]
    %v923 = vld [vmem:[%s907 + $0x78] sm:$0xff]
    %v924 = vld [vmem:[%s907 + $0x80] sm:$0xff]
    %v925 = vld [vmem:[%s907 + $0x88] sm:$0xff]
    %v926 = vld [vmem:[%s907 + $0x90] sm:$0xff]
    %v927 = vld [vmem:[%s907 + $0x98] sm:$0xff]
    %v928 = vld [vmem:[%s907 + $0xa0] sm:$0xf]
    %v929 = vld [vmem:[%s907 + $0xa8] sm:$0xf]
    %v931 = vsel %vm842, %v903, 0
    %v934 = vsel %vm842, %v904, 0
    %v937 = vsel %vm842, %v905, 0
    %v940 = vsel %vm842, %v906, 0
    %vm942 = vcmask 1043456
    %v944 = vsel %vm942, %v928, 0
    %v947 = vsel %vm942, %v929, 0
    %949 = vmatpush.msra.mxu0 0.0
    %950 = vmatpush.msra.mxu0 0.0
    %951 = vmatpush.msra.mxu0 0.0
    %952 = vmatpush.msra.mxu0 0.0
    %953 = vmatpush.msra.mxu0 0.0
    %954 = vmatpush.msra.mxu0 %v944
    %955 = vmatpush.msra.mxu0 %v926
    %956 = vmatpush.msra.mxu0 %v924
    %957 = vmatpush.msra.mxu0 %v922
    %958 = vmatpush.msra.mxu0 %v920
    %959 = vmatpush.msra.mxu0 %v918
    %960 = vmatpush.msra.mxu0 %v916
    %961 = vmatpush.msra.mxu0 %v914
    %962 = vmatpush.msra.mxu0 %v912
    %963 = vmatpush.msra.mxu0 %v910
    %964 = vmatpush.msra.mxu0 %v908
    %965 = vmatmul.f32.gmra.mxu0 %v931
    %v966 = vpop.f32.mrf.mxu0
    %v967 = vadd.f32 0.0, %v966
    %968 = vmatmul.f32.gmra.mxu0 %v934
    %v969 = vpop.f32.mrf.mxu0
    %v970 = vadd.f32 0.0, %v969
    %971 = vmatmul.f32.gmra.mxu0 %v937
    %v972 = vpop.f32.mrf.mxu0
    %v973 = vadd.f32 0.0, %v972
    %974 = vmatmul.f32.gmra.mxu0 %v940
    %v975 = vpop.f32.mrf.mxu0
    %v976 = vadd.f32 0.0, %v975
    %977 = vdwg.mxu0
    %978 = vmatpush.msra.mxu0 0.0
    %979 = vmatpush.msra.mxu0 0.0
    %980 = vmatpush.msra.mxu0 0.0
    %981 = vmatpush.msra.mxu0 0.0
    %982 = vmatpush.msra.mxu0 0.0
    %983 = vmatpush.msra.mxu0 %v947
    %984 = vmatpush.msra.mxu0 %v927
    %985 = vmatpush.msra.mxu0 %v925
    %986 = vmatpush.msra.mxu0 %v923
    %987 = vmatpush.msra.mxu0 %v921
    %988 = vmatpush.msra.mxu0 %v919
    %989 = vmatpush.msra.mxu0 %v917
    %990 = vmatpush.msra.mxu0 %v915
    %991 = vmatpush.msra.mxu0 %v913
    %992 = vmatpush.msra.mxu0 %v911
    %993 = vmatpush.msra.mxu0 %v909
    %994 = vmatmul.f32.gmra.mxu0 %v931
    %v995 = vpop.f32.mrf.mxu0
    %v996 = vadd.f32 0.0, %v995
    %997 = vmatmul.f32.gmra.mxu0 %v934
    %v998 = vpop.f32.mrf.mxu0
    %v999 = vadd.f32 0.0, %v998
    %1000 = vmatmul.f32.gmra.mxu0 %v937
    %v1001 = vpop.f32.mrf.mxu0
    %v1002 = vadd.f32 0.0, %v1001
    %1003 = vmatmul.f32.gmra.mxu0 %v940
    %v1004 = vpop.f32.mrf.mxu0
    %v1005 = vadd.f32 0.0, %v1004
    %1006 = vdwg.mxu0
    %v1008 = vsel %vm842, %v877, 0
    %v1011 = vsel %vm842, %v878, 0
    %v1014 = vsel %vm842, %v879, 0
    %v1017 = vsel %vm842, %v880, 0
    %v1020 = vsel %vm942, %v901, 0
    %v1023 = vsel %vm942, %v902, 0
    %1025 = vmatpush.msra.mxu0 0.0
    %1026 = vmatpush.msra.mxu0 0.0
    %1027 = vmatpush.msra.mxu0 0.0
    %1028 = vmatpush.msra.mxu0 0.0
    %1029 = vmatpush.msra.mxu0 0.0
    %1030 = vmatpush.msra.mxu0 %v1020
    %1031 = vmatpush.msra.mxu0 %v899
    %1032 = vmatpush.msra.mxu0 %v897
    %1033 = vmatpush.msra.mxu0 %v895
    %1034 = vmatpush.msra.mxu0 %v893
    %1035 = vmatpush.msra.mxu0 %v891
    %1036 = vmatpush.msra.mxu0 %v889
    %1037 = vmatpush.msra.mxu0 %v887
    %1038 = vmatpush.msra.mxu0 %v885
    %1039 = vmatpush.msra.mxu0 %v883
    %1040 = vmatpush.msra.mxu0 %v881
    %1041 = vmatmul.f32.gmra.mxu0 %v1008
    %v1042 = vpop.f32.mrf.mxu0
    %v1043 = vadd.f32 %v967, %v1042
    %1044 = vmatmul.f32.gmra.mxu0 %v1011
    %v1045 = vpop.f32.mrf.mxu0
    %v1046 = vadd.f32 %v970, %v1045
    %1047 = vmatmul.f32.gmra.mxu0 %v1014
    %v1048 = vpop.f32.mrf.mxu0
    %v1049 = vadd.f32 %v973, %v1048
    %1050 = vmatmul.f32.gmra.mxu0 %v1017
    %v1051 = vpop.f32.mrf.mxu0
    %v1052 = vadd.f32 %v976, %v1051
    %1053 = vdwg.mxu0
    %1054 = vmatpush.msra.mxu0 0.0
    %1055 = vmatpush.msra.mxu0 0.0
    %1056 = vmatpush.msra.mxu0 0.0
    %1057 = vmatpush.msra.mxu0 0.0
    %1058 = vmatpush.msra.mxu0 0.0
    %1059 = vmatpush.msra.mxu0 %v1023
    %1060 = vmatpush.msra.mxu0 %v900
    %1061 = vmatpush.msra.mxu0 %v898
    %1062 = vmatpush.msra.mxu0 %v896
    %1063 = vmatpush.msra.mxu0 %v894
    %1064 = vmatpush.msra.mxu0 %v892
    %1065 = vmatpush.msra.mxu0 %v890
    %1066 = vmatpush.msra.mxu0 %v888
    %1067 = vmatpush.msra.mxu0 %v886
    %1068 = vmatpush.msra.mxu0 %v884
    %1069 = vmatpush.msra.mxu0 %v882
    %1070 = vmatmul.f32.gmra.mxu0 %v1008
    %v1071 = vpop.f32.mrf.mxu0
    %v1072 = vadd.f32 %v996, %v1071
    %1073 = vmatmul.f32.gmra.mxu0 %v1011
    %v1074 = vpop.f32.mrf.mxu0
    %v1075 = vadd.f32 %v999, %v1074
    %1076 = vmatmul.f32.gmra.mxu0 %v1014
    %v1077 = vpop.f32.mrf.mxu0
    %v1078 = vadd.f32 %v1002, %v1077
    %1079 = vmatmul.f32.gmra.mxu0 %v1017
    %v1080 = vpop.f32.mrf.mxu0
    %v1081 = vadd.f32 %v1005, %v1080
    %1082 = vdwg.mxu0
    %v1083 = vld [vmem:[#allocation3 + $0x2] sm:$0xff]
    %v1084 = vld [vmem:[#allocation3 + $0xa] sm:$0xff]
    %v1085 = vld [vmem:[#allocation3 + $0x12] sm:$0xff]
    %v1086 = vld [vmem:[#allocation3 + $0x1a] sm:$0xf]
    %s1087 = scalar_lea.vmem [#allocation8], 352
    %v1088 = vld [vmem:[%s1087] sm:$0xff]
    %v1089 = vld [vmem:[%s1087 + $0x8] sm:$0xff]
    %v1090 = vld [vmem:[%s1087 + $0x10] sm:$0xff]
    %v1091 = vld [vmem:[%s1087 + $0x18] sm:$0xff]
    %v1092 = vld [vmem:[%s1087 + $0x20] sm:$0xff]
    %v1093 = vld [vmem:[%s1087 + $0x28] sm:$0xff]
    %v1094 = vld [vmem:[%s1087 + $0x30] sm:$0xff]
    %v1095 = vld [vmem:[%s1087 + $0x38] sm:$0xff]
    %v1096 = vld [vmem:[%s1087 + $0x40] sm:$0xff]
    %v1097 = vld [vmem:[%s1087 + $0x48] sm:$0xff]
    %v1098 = vld [vmem:[%s1087 + $0x50] sm:$0xff]
    %v1099 = vld [vmem:[%s1087 + $0x58] sm:$0xff]
    %v1100 = vld [vmem:[%s1087 + $0x60] sm:$0xff]
    %v1101 = vld [vmem:[%s1087 + $0x68] sm:$0xff]
    %v1102 = vld [vmem:[%s1087 + $0x70] sm:$0xff]
    %v1103 = vld [vmem:[%s1087 + $0x78] sm:$0xff]
    %v1104 = vld [vmem:[%s1087 + $0x80] sm:$0xff]
    %v1105 = vld [vmem:[%s1087 + $0x88] sm:$0xff]
    %v1106 = vld [vmem:[%s1087 + $0x90] sm:$0xff]
    %v1107 = vld [vmem:[%s1087 + $0x98] sm:$0xff]
    %v1108 = vld [vmem:[%s1087 + $0xa0] sm:$0xf]
    %v1109 = vld [vmem:[%s1087 + $0xa8] sm:$0xf]
    %v1111 = vsel %vm842, %v1083, 0
    %v1114 = vsel %vm842, %v1084, 0
    %v1117 = vsel %vm842, %v1085, 0
    %v1120 = vsel %vm842, %v1086, 0
    %v1123 = vsel %vm942, %v1108, 0
    %v1126 = vsel %vm942, %v1109, 0
    %1128 = vmatpush.msra.mxu0 0.0
    %1129 = vmatpush.msra.mxu0 0.0
    %1130 = vmatpush.msra.mxu0 0.0
    %1131 = vmatpush.msra.mxu0 0.0
    %1132 = vmatpush.msra.mxu0 0.0
    %1133 = vmatpush.msra.mxu0 %v1123
    %1134 = vmatpush.msra.mxu0 %v1106
    %1135 = vmatpush.msra.mxu0 %v1104
    %1136 = vmatpush.msra.mxu0 %v1102
    %1137 = vmatpush.msra.mxu0 %v1100
    %1138 = vmatpush.msra.mxu0 %v1098
    %1139 = vmatpush.msra.mxu0 %v1096
    %1140 = vmatpush.msra.mxu0 %v1094
    %1141 = vmatpush.msra.mxu0 %v1092
    %1142 = vmatpush.msra.mxu0 %v1090
    %1143 = vmatpush.msra.mxu0 %v1088
    %1144 = vmatmul.f32.gmra.mxu0 %v1111
    %v1145 = vpop.f32.mrf.mxu0
    %v1146 = vadd.f32 0.0, %v1145
    %1147 = vmatmul.f32.gmra.mxu0 %v1114
    %v1148 = vpop.f32.mrf.mxu0
    %v1149 = vadd.f32 0.0, %v1148
    %1150 = vmatmul.f32.gmra.mxu0 %v1117
    %v1151 = vpop.f32.mrf.mxu0
    %v1152 = vadd.f32 0.0, %v1151
    %1153 = vmatmul.f32.gmra.mxu0 %v1120
    %v1154 = vpop.f32.mrf.mxu0
    %v1155 = vadd.f32 0.0, %v1154
    %1156 = vdwg.mxu0
    %1157 = vmatpush.msra.mxu0 0.0
    %1158 = vmatpush.msra.mxu0 0.0
    %1159 = vmatpush.msra.mxu0 0.0
    %1160 = vmatpush.msra.mxu0 0.0
    %1161 = vmatpush.msra.mxu0 0.0
    %1162 = vmatpush.msra.mxu0 %v1126
    %1163 = vmatpush.msra.mxu0 %v1107
    %1164 = vmatpush.msra.mxu0 %v1105
    %1165 = vmatpush.msra.mxu0 %v1103
    %1166 = vmatpush.msra.mxu0 %v1101
    %1167 = vmatpush.msra.mxu0 %v1099
    %1168 = vmatpush.msra.mxu0 %v1097
    %1169 = vmatpush.msra.mxu0 %v1095
    %1170 = vmatpush.msra.mxu0 %v1093
    %1171 = vmatpush.msra.mxu0 %v1091
    %1172 = vmatpush.msra.mxu0 %v1089
    %1173 = vmatmul.f32.gmra.mxu0 %v1111
    %v1174 = vpop.f32.mrf.mxu0
    %v1175 = vadd.f32 0.0, %v1174
    %1176 = vmatmul.f32.gmra.mxu0 %v1114
    %v1177 = vpop.f32.mrf.mxu0
    %v1178 = vadd.f32 0.0, %v1177
    %1179 = vmatmul.f32.gmra.mxu0 %v1117
    %v1180 = vpop.f32.mrf.mxu0
    %v1181 = vadd.f32 0.0, %v1180
    %1182 = vmatmul.f32.gmra.mxu0 %v1120
    %v1183 = vpop.f32.mrf.mxu0
    %v1184 = vadd.f32 0.0, %v1183
    %1185 = vdwg.mxu0
    %v1186 = vadd.f32 %v1043, %v1146
    %v1187 = vadd.f32 %v1072, %v1175
    %v1188 = vadd.f32 %v1046, %v1149
    %v1189 = vadd.f32 %v1075, %v1178
    %v1190 = vadd.f32 %v1049, %v1152
    %v1191 = vadd.f32 %v1078, %v1181
    %v1192 = vadd.f32 %v1052, %v1155
    %v1193 = vadd.f32 %v1081, %v1184
    %v1194 = vld [vmem:[#allocation3 + $0x3] sm:$0xff]
    %v1195 = vld [vmem:[#allocation3 + $0xb] sm:$0xff]
    %v1196 = vld [vmem:[#allocation3 + $0x13] sm:$0xff]
    %v1197 = vld [vmem:[#allocation3 + $0x1b] sm:$0xf]
    %s1198 = scalar_lea.vmem [#allocation8], 528
    %v1199 = vld [vmem:[%s1198] sm:$0xff]
    %v1200 = vld [vmem:[%s1198 + $0x8] sm:$0xff]
    %v1201 = vld [vmem:[%s1198 + $0x10] sm:$0xff]
    %v1202 = vld [vmem:[%s1198 + $0x18] sm:$0xff]
    %v1203 = vld [vmem:[%s1198 + $0x20] sm:$0xff]
    %v1204 = vld [vmem:[%s1198 + $0x28] sm:$0xff]
    %v1205 = vld [vmem:[%s1198 + $0x30] sm:$0xff]
    %v1206 = vld [vmem:[%s1198 + $0x38] sm:$0xff]
    %v1207 = vld [vmem:[%s1198 + $0x40] sm:$0xff]
    %v1208 = vld [vmem:[%s1198 + $0x48] sm:$0xff]
    %v1209 = vld [vmem:[%s1198 + $0x50] sm:$0xff]
    %v1210 = vld [vmem:[%s1198 + $0x58] sm:$0xff]
    %v1211 = vld [vmem:[%s1198 + $0x60] sm:$0xff]
    %v1212 = vld [vmem:[%s1198 + $0x68] sm:$0xff]
    %v1213 = vld [vmem:[%s1198 + $0x70] sm:$0xff]
    %v1214 = vld [vmem:[%s1198 + $0x78] sm:$0xff]
    %v1215 = vld [vmem:[%s1198 + $0x80] sm:$0xff]
    %v1216 = vld [vmem:[%s1198 + $0x88] sm:$0xff]
    %v1217 = vld [vmem:[%s1198 + $0x90] sm:$0xff]
    %v1218 = vld [vmem:[%s1198 + $0x98] sm:$0xff]
    %v1219 = vld [vmem:[%s1198 + $0xa0] sm:$0xf]
    %v1220 = vld [vmem:[%s1198 + $0xa8] sm:$0xf]
    %v1222 = vsel %vm842, %v1194, 0
    %v1225 = vsel %vm842, %v1195, 0
    %v1228 = vsel %vm842, %v1196, 0
    %v1231 = vsel %vm842, %v1197, 0
    %v1234 = vsel %vm942, %v1219, 0
    %v1237 = vsel %vm942, %v1220, 0
    %1239 = vmatpush.msra.mxu0 0.0
    %1240 = vmatpush.msra.mxu0 0.0
    %1241 = vmatpush.msra.mxu0 0.0
    %1242 = vmatpush.msra.mxu0 0.0
    %1243 = vmatpush.msra.mxu0 0.0
    %1244 = vmatpush.msra.mxu0 %v1234
    %1245 = vmatpush.msra.mxu0 %v1217
    %1246 = vmatpush.msra.mxu0 %v1215
    %1247 = vmatpush.msra.mxu0 %v1213
    %1248 = vmatpush.msra.mxu0 %v1211
    %1249 = vmatpush.msra.mxu0 %v1209
    %1250 = vmatpush.msra.mxu0 %v1207
    %1251 = vmatpush.msra.mxu0 %v1205
    %1252 = vmatpush.msra.mxu0 %v1203
    %1253 = vmatpush.msra.mxu0 %v1201
    %1254 = vmatpush.msra.mxu0 %v1199
    %1255 = vmatmul.f32.gmra.mxu0 %v1222
    %v1256 = vpop.f32.mrf.mxu0
    %v1257 = vadd.f32 0.0, %v1256
    %1258 = vmatmul.f32.gmra.mxu0 %v1225
    %v1259 = vpop.f32.mrf.mxu0
    %v1260 = vadd.f32 0.0, %v1259
    %1261 = vmatmul.f32.gmra.mxu0 %v1228
    %v1262 = vpop.f32.mrf.mxu0
    %v1263 = vadd.f32 0.0, %v1262
    %1264 = vmatmul.f32.gmra.mxu0 %v1231
    %v1265 = vpop.f32.mrf.mxu0
    %v1266 = vadd.f32 0.0, %v1265
    %1267 = vdwg.mxu0
    %1268 = vmatpush.msra.mxu0 0.0
    %1269 = vmatpush.msra.mxu0 0.0
    %1270 = vmatpush.msra.mxu0 0.0
    %1271 = vmatpush.msra.mxu0 0.0
    %1272 = vmatpush.msra.mxu0 0.0
    %1273 = vmatpush.msra.mxu0 %v1237
    %1274 = vmatpush.msra.mxu0 %v1218
    %1275 = vmatpush.msra.mxu0 %v1216
    %1276 = vmatpush.msra.mxu0 %v1214
    %1277 = vmatpush.msra.mxu0 %v1212
    %1278 = vmatpush.msra.mxu0 %v1210
    %1279 = vmatpush.msra.mxu0 %v1208
    %1280 = vmatpush.msra.mxu0 %v1206
    %1281 = vmatpush.msra.mxu0 %v1204
    %1282 = vmatpush.msra.mxu0 %v1202
    %1283 = vmatpush.msra.mxu0 %v1200
    %1284 = vmatmul.f32.gmra.mxu0 %v1222
    %v1285 = vpop.f32.mrf.mxu0
    %v1286 = vadd.f32 0.0, %v1285
    %1287 = vmatmul.f32.gmra.mxu0 %v1225
    %v1288 = vpop.f32.mrf.mxu0
    %v1289 = vadd.f32 0.0, %v1288
    %1290 = vmatmul.f32.gmra.mxu0 %v1228
    %v1291 = vpop.f32.mrf.mxu0
    %v1292 = vadd.f32 0.0, %v1291
    %1293 = vmatmul.f32.gmra.mxu0 %v1231
    %v1294 = vpop.f32.mrf.mxu0
    %v1295 = vadd.f32 0.0, %v1294
    %1296 = vdwg.mxu0
    %v1297 = vadd.f32 %v1186, %v1257
    %v1298 = vadd.f32 %v1187, %v1286
    %v1299 = vadd.f32 %v1188, %v1260
    %v1300 = vadd.f32 %v1189, %v1289
    %v1301 = vadd.f32 %v1190, %v1263
    %v1302 = vadd.f32 %v1191, %v1292
    %v1303 = vadd.f32 %v1192, %v1266
    %v1304 = vadd.f32 %v1193, %v1295
    %v1305 = vld [vmem:[#allocation3 + $0x4] sm:$0xff]
    %v1306 = vld [vmem:[#allocation3 + $0xc] sm:$0xff]
    %v1307 = vld [vmem:[#allocation3 + $0x14] sm:$0xff]
    %v1308 = vld [vmem:[#allocation3 + $0x1c] sm:$0xf]
    %s1309 = scalar_lea.vmem [#allocation8], 704
    %v1310 = vld [vmem:[%s1309] sm:$0xff]
    %v1311 = vld [vmem:[%s1309 + $0x8] sm:$0xff]
    %v1312 = vld [vmem:[%s1309 + $0x10] sm:$0xff]
    %v1313 = vld [vmem:[%s1309 + $0x18] sm:$0xff]
    %v1314 = vld [vmem:[%s1309 + $0x20] sm:$0xff]
    %v1315 = vld [vmem:[%s1309 + $0x28] sm:$0xff]
    %v1316 = vld [vmem:[%s1309 + $0x30] sm:$0xff]
    %v1317 = vld [vmem:[%s1309 + $0x38] sm:$0xff]
    %v1318 = vld [vmem:[%s1309 + $0x40] sm:$0xff]
    %v1319 = vld [vmem:[%s1309 + $0x48] sm:$0xff]
    %v1320 = vld [vmem:[%s1309 + $0x50] sm:$0xff]
    %v1321 = vld [vmem:[%s1309 + $0x58] sm:$0xff]
    %v1322 = vld [vmem:[%s1309 + $0x60] sm:$0xff]
    %v1323 = vld [vmem:[%s1309 + $0x68] sm:$0xff]
    %v1324 = vld [vmem:[%s1309 + $0x70] sm:$0xff]
    %v1325 = vld [vmem:[%s1309 + $0x78] sm:$0xff]
    %v1326 = vld [vmem:[%s1309 + $0x80] sm:$0xff]
    %v1327 = vld [vmem:[%s1309 + $0x88] sm:$0xff]
    %v1328 = vld [vmem:[%s1309 + $0x90] sm:$0xff]
    %v1329 = vld [vmem:[%s1309 + $0x98] sm:$0xff]
    %v1330 = vld [vmem:[%s1309 + $0xa0] sm:$0xf]
    %v1331 = vld [vmem:[%s1309 + $0xa8] sm:$0xf]
    %v1333 = vsel %vm842, %v1305, 0
    %v1336 = vsel %vm842, %v1306, 0
    %v1339 = vsel %vm842, %v1307, 0
    %v1342 = vsel %vm842, %v1308, 0
    %v1345 = vsel %vm942, %v1330, 0
    %v1348 = vsel %vm942, %v1331, 0
    %1350 = vmatpush.msra.mxu0 0.0
    %1351 = vmatpush.msra.mxu0 0.0
    %1352 = vmatpush.msra.mxu0 0.0
    %1353 = vmatpush.msra.mxu0 0.0
    %1354 = vmatpush.msra.mxu0 0.0
    %1355 = vmatpush.msra.mxu0 %v1345
    %1356 = vmatpush.msra.mxu0 %v1328
    %1357 = vmatpush.msra.mxu0 %v1326
    %1358 = vmatpush.msra.mxu0 %v1324
    %1359 = vmatpush.msra.mxu0 %v1322
    %1360 = vmatpush.msra.mxu0 %v1320
    %1361 = vmatpush.msra.mxu0 %v1318
    %1362 = vmatpush.msra.mxu0 %v1316
    %1363 = vmatpush.msra.mxu0 %v1314
    %1364 = vmatpush.msra.mxu0 %v1312
    %1365 = vmatpush.msra.mxu0 %v1310
    %1366 = vmatmul.f32.gmra.mxu0 %v1333
    %v1367 = vpop.f32.mrf.mxu0
    %v1368 = vadd.f32 0.0, %v1367
    %1369 = vmatmul.f32.gmra.mxu0 %v1336
    %v1370 = vpop.f32.mrf.mxu0
    %v1371 = vadd.f32 0.0, %v1370
    %1372 = vmatmul.f32.gmra.mxu0 %v1339
    %v1373 = vpop.f32.mrf.mxu0
    %v1374 = vadd.f32 0.0, %v1373
    %1375 = vmatmul.f32.gmra.mxu0 %v1342
    %v1376 = vpop.f32.mrf.mxu0
    %v1377 = vadd.f32 0.0, %v1376
    %1378 = vdwg.mxu0
    %1379 = vmatpush.msra.mxu0 0.0
    %1380 = vmatpush.msra.mxu0 0.0
    %1381 = vmatpush.msra.mxu0 0.0
    %1382 = vmatpush.msra.mxu0 0.0
    %1383 = vmatpush.msra.mxu0 0.0
    %1384 = vmatpush.msra.mxu0 %v1348
    %1385 = vmatpush.msra.mxu0 %v1329
    %1386 = vmatpush.msra.mxu0 %v1327
    %1387 = vmatpush.msra.mxu0 %v1325
    %1388 = vmatpush.msra.mxu0 %v1323
    %1389 = vmatpush.msra.mxu0 %v1321
    %1390 = vmatpush.msra.mxu0 %v1319
    %1391 = vmatpush.msra.mxu0 %v1317
    %1392 = vmatpush.msra.mxu0 %v1315
    %1393 = vmatpush.msra.mxu0 %v1313
    %1394 = vmatpush.msra.mxu0 %v1311
    %1395 = vmatmul.f32.gmra.mxu0 %v1333
    %v1396 = vpop.f32.mrf.mxu0
    %v1397 = vadd.f32 0.0, %v1396
    %1398 = vmatmul.f32.gmra.mxu0 %v1336
    %v1399 = vpop.f32.mrf.mxu0
    %v1400 = vadd.f32 0.0, %v1399
    %1401 = vmatmul.f32.gmra.mxu0 %v1339
    %v1402 = vpop.f32.mrf.mxu0
    %v1403 = vadd.f32 0.0, %v1402
    %1404 = vmatmul.f32.gmra.mxu0 %v1342
    %v1405 = vpop.f32.mrf.mxu0
    %v1406 = vadd.f32 0.0, %v1405
    %1407 = vdwg.mxu0
    %v1408 = vadd.f32 %v1297, %v1368
    %v1409 = vadd.f32 %v1298, %v1397
    %v1410 = vadd.f32 %v1299, %v1371
    %v1411 = vadd.f32 %v1300, %v1400
    %v1412 = vadd.f32 %v1301, %v1374
    %v1413 = vadd.f32 %v1302, %v1403
    %v1414 = vadd.f32 %v1303, %v1377
    %v1415 = vadd.f32 %v1304, %v1406
    %v1417 = vperm.slane %v876, 0
    %v1419 = vadd.f32 %v1408, %v1417
    %v1420 = vadd.f32 %v1410, %v1417
    %v1421 = vadd.f32 %v1412, %v1417
    %v1422 = vadd.f32 %v1414, %v1417
    %v1423 = vmax.f32 %v1419, 0.0
    %v1424 = vmax.f32 %v1420, 0.0
    %v1425 = vmax.f32 %v1421, 0.0
    %v1426 = vmax.f32 %v1422, 0.0
    %v1427 = vadd.f32 %v1409, %v1417
    %v1428 = vadd.f32 %v1411, %v1417
    %v1429 = vadd.f32 %v1413, %v1417
    %v1430 = vadd.f32 %v1415, %v1417
    %v1431 = vmax.f32 %v1427, 0.0
    %v1432 = vmax.f32 %v1428, 0.0
    %v1433 = vmax.f32 %v1429, 0.0
    %v1434 = vmax.f32 %v1430, 0.0
    %v1435 = vadd.f32 %v1423, %v1431
    %v1436 = vadd.f32 %v1424, %v1432
    %v1437 = vadd.f32 %v1425, %v1433
    %v1438 = vadd.f32 %v1426, %v1434
    %vm1439 = vcmask 654336
    %1440 = vst.msk [vmem:[#allocation4] sm:$0xff] %vm1439, %v1435
    %1441 = vst.msk [vmem:[#allocation4 + $0x8] sm:$0xff] %vm1439, %v1436
    %1442 = vst.msk [vmem:[#allocation4 + $0x10] sm:$0xff] %vm1439, %v1437
    %vm1443 = vcmask 650240
    %1444 = vst.msk [vmem:[#allocation4 + $0x18] sm:$0xf] %vm1443, %v1438
    %v1445 = vld [vmem:[#allocation4] ss:$16 sm:$0x3]
    %s1446 = scalar_lea.vmem [#allocation4], 1
    %v1447 = vld [vmem:[%s1446] ss:$16 sm:$0x3]
    %v1448 = vadd.f32 %v1445, %v1447
    %v1449 = vmul.f32 %v1448, 0.25
    %v1450 = vld [vmem:[%s5] sm:$0xff]
    %v1451 = vld [vmem:[%s5 + $0x8] sm:$0xff]
    %v1452 = vld [vmem:[%s5 + $0x10] sm:$0xff]
    %v1453 = vld [vmem:[%s5 + $0x18] sm:$0xff]
    %v1454 = vld [vmem:[%s5 + $0x20] sm:$0xff]
    %v1455 = vld [vmem:[%s5 + $0x28] sm:$0xff]
    %v1456 = vld [vmem:[%s5 + $0x30] sm:$0xff]
    %v1457 = vld [vmem:[%s5 + $0x38] sm:$0xff]
    %v1458 = vld [vmem:[%s5 + $0x40] sm:$0xff]
    %v1459 = vld [vmem:[%s5 + $0x48] sm:$0xff]
    %s1460 = scalar_lea.vmem [#allocation4], 2
    %v1461 = vld [vmem:[%s1460] ss:$16 sm:$0x3]
    %s1462 = scalar_lea.vmem [#allocation4], 3
    %v1463 = vld [vmem:[%s1462] ss:$16 sm:$0x3]
    %v1464 = vadd.f32 %v1461, %v1463
    %v1465 = vmul.f32 %v1464, 0.25
    %s1466 = scalar_lea.vmem %s5, 80
    %v1467 = vld [vmem:[%s1466] sm:$0xff]
    %v1468 = vld [vmem:[%s1466 + $0x8] sm:$0xff]
    %v1469 = vld [vmem:[%s1466 + $0x10] sm:$0xff]
    %v1470 = vld [vmem:[%s1466 + $0x18] sm:$0xff]
    %v1471 = vld [vmem:[%s1466 + $0x20] sm:$0xff]
    %v1472 = vld [vmem:[%s1466 + $0x28] sm:$0xff]
    %v1473 = vld [vmem:[%s1466 + $0x30] sm:$0xff]
    %v1474 = vld [vmem:[%s1466 + $0x38] sm:$0xff]
    %v1475 = vld [vmem:[%s1466 + $0x40] sm:$0xff]
    %v1476 = vld [vmem:[%s1466 + $0x48] sm:$0xff]
    %v1478 = vsel %vm1439, %v1465, 0
    %1480 = vmatpush.msra.mxu0 0.0
    %1481 = vmatpush.msra.mxu0 0.0
    %1482 = vmatpush.msra.mxu0 0.0
    %1483 = vmatpush.msra.mxu0 0.0
    %1484 = vmatpush.msra.mxu0 0.0
    %1485 = vmatpush.msra.mxu0 0.0
    %1486 = vmatpush.msra.mxu0 %v1476
    %1487 = vmatpush.msra.mxu0 %v1475
    %1488 = vmatpush.msra.mxu0 %v1474
    %1489 = vmatpush.msra.mxu0 %v1473
    %1490 = vmatpush.msra.mxu0 %v1472
    %1491 = vmatpush.msra.mxu0 %v1471
    %1492 = vmatpush.msra.mxu0 %v1470
    %1493 = vmatpush.msra.mxu0 %v1469
    %1494 = vmatpush.msra.mxu0 %v1468
    %1495 = vmatpush.msra.mxu0 %v1467
    %1496 = vmatmul.f32.gmra.mxu0 %v1478
    %v1497 = vpop.f32.mrf.mxu0
    %v1498 = vadd.f32 0.0, %v1497
    %1499 = vdwg.mxu0
    %v1501 = vsel %vm1439, %v1449, 0
    %1503 = vmatpush.msra.mxu0 0.0
    %1504 = vmatpush.msra.mxu0 0.0
    %1505 = vmatpush.msra.mxu0 0.0
    %1506 = vmatpush.msra.mxu0 0.0
    %1507 = vmatpush.msra.mxu0 0.0
    %1508 = vmatpush.msra.mxu0 0.0
    %1509 = vmatpush.msra.mxu0 %v1459
    %1510 = vmatpush.msra.mxu0 %v1458
    %1511 = vmatpush.msra.mxu0 %v1457
    %1512 = vmatpush.msra.mxu0 %v1456
    %1513 = vmatpush.msra.mxu0 %v1455
    %1514 = vmatpush.msra.mxu0 %v1454
    %1515 = vmatpush.msra.mxu0 %v1453
    %1516 = vmatpush.msra.mxu0 %v1452
    %1517 = vmatpush.msra.mxu0 %v1451
    %1518 = vmatpush.msra.mxu0 %v1450
    %1519 = vmatmul.f32.gmra.mxu0 %v1501
    %v1520 = vpop.f32.mrf.mxu0
    %v1521 = vadd.f32 %v1498, %v1520
    %1522 = vdwg.mxu0
    %s1523 = scalar_lea.vmem [#allocation4], 4
    %v1524 = vld [vmem:[%s1523] ss:$16 sm:$0x3]
    %s1525 = scalar_lea.vmem [#allocation4], 5
    %v1526 = vld [vmem:[%s1525] ss:$16 sm:$0x3]
    %v1527 = vadd.f32 %v1524, %v1526
    %v1528 = vmul.f32 %v1527, 0.25
    %s1529 = scalar_lea.vmem %s5, 160
    %v1530 = vld [vmem:[%s1529] sm:$0xff]
    %v1531 = vld [vmem:[%s1529 + $0x8] sm:$0xff]
    %v1532 = vld [vmem:[%s1529 + $0x10] sm:$0xff]
    %v1533 = vld [vmem:[%s1529 + $0x18] sm:$0xff]
    %v1534 = vld [vmem:[%s1529 + $0x20] sm:$0xff]
    %v1535 = vld [vmem:[%s1529 + $0x28] sm:$0xff]
    %v1536 = vld [vmem:[%s1529 + $0x30] sm:$0xff]
    %v1537 = vld [vmem:[%s1529 + $0x38] sm:$0xff]
    %v1538 = vld [vmem:[%s1529 + $0x40] sm:$0xff]
    %v1539 = vld [vmem:[%s1529 + $0x48] sm:$0xff]
    %v1541 = vsel %vm1439, %v1528, 0
    %1543 = vmatpush.msra.mxu0 0.0
    %1544 = vmatpush.msra.mxu0 0.0
    %1545 = vmatpush.msra.mxu0 0.0
    %1546 = vmatpush.msra.mxu0 0.0
    %1547 = vmatpush.msra.mxu0 0.0
    %1548 = vmatpush.msra.mxu0 0.0
    %1549 = vmatpush.msra.mxu0 %v1539
    %1550 = vmatpush.msra.mxu0 %v1538
    %1551 = vmatpush.msra.mxu0 %v1537
    %1552 = vmatpush.msra.mxu0 %v1536
    %1553 = vmatpush.msra.mxu0 %v1535
    %1554 = vmatpush.msra.mxu0 %v1534
    %1555 = vmatpush.msra.mxu0 %v1533
    %1556 = vmatpush.msra.mxu0 %v1532
    %1557 = vmatpush.msra.mxu0 %v1531
    %1558 = vmatpush.msra.mxu0 %v1530
    %1559 = vmatmul.f32.gmra.mxu0 %v1541
    %v1560 = vpop.f32.mrf.mxu0
    %v1561 = vadd.f32 0.0, %v1560
    %1562 = vdwg.mxu0
    %v1563 = vadd.f32 %v1521, %v1561
    %s1564 = scalar_lea.vmem [#allocation4], 6
    %v1565 = vld [vmem:[%s1564] ss:$16 sm:$0x3]
    %s1566 = scalar_lea.vmem [#allocation4], 7
    %v1567 = vld [vmem:[%s1566] ss:$16 sm:$0x3]
    %v1568 = vadd.f32 %v1565, %v1567
    %v1569 = vmul.f32 %v1568, 0.25
    %s1570 = scalar_lea.vmem %s5, 240
    %v1571 = vld [vmem:[%s1570] sm:$0xff]
    %v1572 = vld [vmem:[%s1570 + $0x8] sm:$0xff]
    %v1573 = vld [vmem:[%s1570 + $0x10] sm:$0xff]
    %v1574 = vld [vmem:[%s1570 + $0x18] sm:$0xff]
    %v1575 = vld [vmem:[%s1570 + $0x20] sm:$0xff]
    %v1576 = vld [vmem:[%s1570 + $0x28] sm:$0xff]
    %v1577 = vld [vmem:[%s1570 + $0x30] sm:$0xff]
    %v1578 = vld [vmem:[%s1570 + $0x38] sm:$0xff]
    %v1579 = vld [vmem:[%s1570 + $0x40] sm:$0xff]
    %v1580 = vld [vmem:[%s1570 + $0x48] sm:$0xff]
    %v1582 = vsel %vm1439, %v1569, 0
    %1584 = vmatpush.msra.mxu0 0.0
    %1585 = vmatpush.msra.mxu0 0.0
    %1586 = vmatpush.msra.mxu0 0.0
    %1587 = vmatpush.msra.mxu0 0.0
    %1588 = vmatpush.msra.mxu0 0.0
    %1589 = vmatpush.msra.mxu0 0.0
    %1590 = vmatpush.msra.mxu0 %v1580
    %1591 = vmatpush.msra.mxu0 %v1579
    %1592 = vmatpush.msra.mxu0 %v1578
    %1593 = vmatpush.msra.mxu0 %v1577
    %1594 = vmatpush.msra.mxu0 %v1576
    %1595 = vmatpush.msra.mxu0 %v1575
    %1596 = vmatpush.msra.mxu0 %v1574
    %1597 = vmatpush.msra.mxu0 %v1573
    %1598 = vmatpush.msra.mxu0 %v1572
    %1599 = vmatpush.msra.mxu0 %v1571
    %1600 = vmatmul.f32.gmra.mxu0 %v1582
    %v1601 = vpop.f32.mrf.mxu0
    %v1602 = vadd.f32 0.0, %v1601
    %1603 = vdwg.mxu0
    %v1604 = vadd.f32 %v1563, %v1602
    %s1605 = scalar_lea.vmem [#allocation4], 8
    %v1606 = vld [vmem:[%s1605] ss:$16 sm:$0x3]
    %s1607 = scalar_lea.vmem [#allocation4], 9
    %v1608 = vld [vmem:[%s1607] ss:$16 sm:$0x3]
    %v1609 = vadd.f32 %v1606, %v1608
    %v1610 = vmul.f32 %v1609, 0.25
    %s1611 = scalar_lea.vmem %s5, 320
    %v1612 = vld [vmem:[%s1611] sm:$0xff]
    %v1613 = vld [vmem:[%s1611 + $0x8] sm:$0xff]
    %v1614 = vld [vmem:[%s1611 + $0x10] sm:$0xff]
    %v1615 = vld [vmem:[%s1611 + $0x18] sm:$0xff]
    %v1616 = vld [vmem:[%s1611 + $0x20] sm:$0xff]
    %v1617 = vld [vmem:[%s1611 + $0x28] sm:$0xff]
    %v1618 = vld [vmem:[%s1611 + $0x30] sm:$0xff]
    %v1619 = vld [vmem:[%s1611 + $0x38] sm:$0xff]
    %v1620 = vld [vmem:[%s1611 + $0x40] sm:$0xff]
    %v1621 = vld [vmem:[%s1611 + $0x48] sm:$0xff]
    %v1623 = vsel %vm1439, %v1610, 0
    %1625 = vmatpush.msra.mxu0 0.0
    %1626 = vmatpush.msra.mxu0 0.0
    %1627 = vmatpush.msra.mxu0 0.0
    %1628 = vmatpush.msra.mxu0 0.0
    %1629 = vmatpush.msra.mxu0 0.0
    %1630 = vmatpush.msra.mxu0 0.0
    %1631 = vmatpush.msra.mxu0 %v1621
    %1632 = vmatpush.msra.mxu0 %v1620
    %1633 = vmatpush.msra.mxu0 %v1619
    %1634 = vmatpush.msra.mxu0 %v1618
    %1635 = vmatpush.msra.mxu0 %v1617
    %1636 = vmatpush.msra.mxu0 %v1616
    %1637 = vmatpush.msra.mxu0 %v1615
    %1638 = vmatpush.msra.mxu0 %v1614
    %1639 = vmatpush.msra.mxu0 %v1613
    %1640 = vmatpush.msra.mxu0 %v1612
    %1641 = vmatmul.f32.gmra.mxu0 %v1623
    %v1642 = vpop.f32.mrf.mxu0
    %v1643 = vadd.f32 0.0, %v1642
    %1644 = vdwg.mxu0
    %v1645 = vadd.f32 %v1604, %v1643
    %v1646 = vld [vmem:[%s6] sm:$0x1]
    %v1648 = vperm.slane %v1646, 0
    %v1650 = vadd.f32 %v1645, %v1648
    %v1651 = vmax.f32 %v1650, 0.0
    %v1652 = vld [vmem:[%s7] sm:$0xff]
    %v1653 = vld [vmem:[%s7 + $0x8] sm:$0xff]
    %v1654 = vld [vmem:[%s7 + $0x10] sm:$0xff]
    %v1655 = vld [vmem:[%s7 + $0x18] sm:$0xff]
    %v1656 = vld [vmem:[%s7 + $0x20] sm:$0xff]
    %v1657 = vld [vmem:[%s7 + $0x28] sm:$0xff]
    %v1658 = vld [vmem:[%s7 + $0x30] sm:$0xff]
    %v1659 = vld [vmem:[%s7 + $0x38] sm:$0xff]
    %v1660 = vld [vmem:[%s7 + $0x40] sm:$0xff]
    %v1661 = vld [vmem:[%s7 + $0x48] sm:$0xff]
    %v1662 = vld [vmem:[%s7 + $0x50] sm:$0xff]
    %v1663 = vld [vmem:[%s7 + $0x58] sm:$0xff]
    %v1664 = vld [vmem:[%s7 + $0x60] sm:$0xff]
    %v1665 = vld [vmem:[%s7 + $0x68] sm:$0xff]
    %v1666 = vld [vmem:[%s7 + $0x70] sm:$0xff]
    %v1667 = vld [vmem:[%s8] sm:$0x1]
    %v1669 = vperm.slane %v1667, 0
    %vm1671 = vcmask 982016
    %v1673 = vsel %vm1671, %v1651, 0
    %1675 = vmatpush.msra.mxu0 0.0
    %1676 = vmatpush.msra.mxu0 %v1666
    %1677 = vmatpush.msra.mxu0 %v1665
    %1678 = vmatpush.msra.mxu0 %v1664
    %1679 = vmatpush.msra.mxu0 %v1663
    %1680 = vmatpush.msra.mxu0 %v1662
    %1681 = vmatpush.msra.mxu0 %v1661
    %1682 = vmatpush.msra.mxu0 %v1660
    %1683 = vmatpush.msra.mxu0 %v1659
    %1684 = vmatpush.msra.mxu0 %v1658
    %1685 = vmatpush.msra.mxu0 %v1657
    %1686 = vmatpush.msra.mxu0 %v1656
    %1687 = vmatpush.msra.mxu0 %v1655
    %1688 = vmatpush.msra.mxu0 %v1654
    %1689 = vmatpush.msra.mxu0 %v1653
    %1690 = vmatpush.msra.mxu0 %v1652
    %1691 = vmatmul.f32.gmra.mxu0 %v1673
    %v1692 = vpop.f32.mrf.mxu0
    %v1693 = vadd.f32 %v1669, %v1692
    %1694 = vdwg.mxu0
    %v1695 = vmax.f32 %v1693, 0.0
    %v1696 = vld [vmem:[%s9] sm:$0xff]
    %v1697 = vld [vmem:[%s9 + $0x8] sm:$0xff]
    %v1698 = vld [vmem:[%s9 + $0x10] sm:$0xff]
    %v1699 = vld [vmem:[%s9 + $0x18] sm:$0xff]
    %v1700 = vld [vmem:[%s9 + $0x20] sm:$0xff]
    %v1701 = vld [vmem:[%s9 + $0x28] sm:$0xff]
    %v1702 = vld [vmem:[%s9 + $0x30] sm:$0xff]
    %v1703 = vld [vmem:[%s9 + $0x38] sm:$0xff]
    %v1704 = vld [vmem:[%s9 + $0x40] sm:$0xff]
    %v1705 = vld [vmem:[%s9 + $0x48] sm:$0xff]
    %v1706 = vld [vmem:[%s9 + $0x50] sm:$0xf]
    %v1707 = vld [vmem:[%s10] sm:$0x1]
    %v1709 = vperm.slane %v1707, 0
    %v1712 = vsel %vm842, %v1695, 0
    %v1715 = vsel %vm942, %v1706, 0
    %1717 = vmatpush.msra.mxu0 0.0
    %1718 = vmatpush.msra.mxu0 0.0
    %1719 = vmatpush.msra.mxu0 0.0
    %1720 = vmatpush.msra.mxu0 0.0
    %1721 = vmatpush.msra.mxu0 0.0
    %1722 = vmatpush.msra.mxu0 %v1715
    %1723 = vmatpush.msra.mxu0 %v1705
    %1724 = vmatpush.msra.mxu0 %v1704
    %1725 = vmatpush.msra.mxu0 %v1703
    %1726 = vmatpush.msra.mxu0 %v1702
    %1727 = vmatpush.msra.mxu0 %v1701
    %1728 = vmatpush.msra.mxu0 %v1700
    %1729 = vmatpush.msra.mxu0 %v1699
    %1730 = vmatpush.msra.mxu0 %v1698
    %1731 = vmatpush.msra.mxu0 %v1697
    %1732 = vmatpush.msra.mxu0 %v1696
    %1733 = vmatmul.f32.gmra.mxu0 %v1712
    %v1734 = vpop.f32.mrf.mxu0
    %v1735 = vadd.f32 %v1709, %v1734
    %1736 = vdwg.mxu0
    %vm1737 = vcmask 74752
    %1738 = vst.msk [vmem:[#allocation10] sm:$0x3] %vm1737, %v1735
    // Predicated region
    $region54: #{lenet_forward.1} parent=1 // pred_check
      _
    $region55: #{lenet_forward.1} parent=1 // pred_check_branch
      %1740 = sbr.rel (0) target = $region57
    $region56: #{lenet_forward.1} parent=1 // pred_region
      %1742 = vsyncadd [#allocation7], 0
      %s1744 = sshll.u32 [#allocation10], 4
      %s1745 = int_to_ptr.vmem [resolvable:$true] %s1744
      %s1746 = sshll.u32 %s11, 4
      %s1747 = int_to_ptr.hbm [resolvable:$true] %s1746
      %1749 = dma.vmem_to_hbm [thread:$0]  %s1745, 32, %s1747, [#allocation7]
    $region57: #{lenet_forward.1} parent=1 // pred_fallthru
      _
    // Predicated region
    $region58: #{lenet_forward.1} parent=1 // pred_check
      _
    $region59: #{lenet_forward.1} parent=1 // pred_check_branch
      %1751 = sbr.rel (0) target = $region61
    $region60: #{lenet_forward.1} parent=1 // pred_region
      %1753 = dma.done [#allocation7], 32
    $region61: #{lenet_forward.1} parent=1 // pred_fallthru
      _
    %1754 = vsyncpa [#allocation6], 1
    %1755 = vsyncpa [#allocation9], 1
    %1756 = vsyncpa [#allocation7], 1

</llo_original>
